<compile_context>
chip_gen: v6e
topology: v6e:2x2x1
jax: 0.10.0
libtpu: 0.0.40
codegen_flags: <defaults>
</compile_context>

<pallas_src>
import functools

import jax
import jax.numpy as jnp
from jax import lax
from jax.experimental import pallas as pl
from jax.experimental.pallas import tpu as pltpu

LN_EPS = 1e-5
_GELU_C = 0.7978845608028654  # sqrt(2/pi)


def _layernorm_f32(x, gamma, beta):
    mean = jnp.mean(x, axis=-1, keepdims=True)
    xc = x - mean
    var = jnp.mean(xc * xc, axis=-1, keepdims=True)
    return xc * lax.rsqrt(var + LN_EPS) * gamma + beta


def _gelu_tanh(x):
    # TODO(synk): PyTorch nn.GELU() defaults to the exact erf form; the tanh
    # approximation deviates by <~3e-3 but keeps the transcendental on the EUP.
    return 0.5 * x * (1.0 + jnp.tanh(_GELU_C * (x + 0.044715 * x * x * x)))


def block_kernel(x_ref, g1_ref, b1_ref,
                 wqkv_ref, wproj_ref, bproj_ref,
                 g2_ref, b2_ref,
                 wfc1_ref, bfc1_ref, wfc2_ref, bfc2_ref,
                 out_ref, attn_ref, *, num_heads, scale):
    wdt = wqkv_ref.dtype                                  # MXU input dtype (bf16 recommended)

    x = x_ref[0].astype(jnp.float32)                      # (N, C)
    N, C = x.shape
    hd = C // num_heads

    # ---- norm1 ----
    xn1 = _layernorm_f32(x, g1_ref[...].astype(jnp.float32),
                         b1_ref[...].astype(jnp.float32))

    # ---- fused QKV projection: one lane-dense matmul, full K=C depth ----
    qkv = jnp.dot(xn1.astype(wdt), wqkv_ref[...],
                  preferred_element_type=jnp.float32)      # (N, 3C) f32

    # ---- attention, per head (static loop: static lane offsets) ----
    for h in range(num_heads):
        qh = qkv[:, h * hd:(h + 1) * hd]                   # (N, hd)
        kh = qkv[:, C + h * hd:C + (h + 1) * hd]           # (N, hd)
        vh = qkv[:, 2 * C + h * hd:2 * C + (h + 1) * hd]   # (N, hd)

        # Contract the last dim of BOTH operands -> q @ k^T, no XLU transpose.
        s = lax.dot_general(qh.astype(wdt), kh.astype(wdt),
                            (((1,), (1,)), ((), ())),
                            preferred_element_type=jnp.float32) * scale   # (N, N)
        s = s - jnp.max(s, axis=-1, keepdims=True)
        p = jnp.exp(s)
        p = p * pl.reciprocal(jnp.sum(p, axis=-1, keepdims=True), approx=True)

        oh = jnp.dot(p.astype(wdt), vh.astype(wdt),
                     preferred_element_type=jnp.float32)   # (N, hd)
        # Store into the (N, C) attention-output scratch: this is the "head
        # concat" and it bounds oh's live range right here.
        attn_ref[:, h * hd:(h + 1) * hd] = oh

    # ---- output projection: single lane-dense (N, C) @ (C, C), K=C ----
    proj = jnp.dot(attn_ref[...].astype(wdt), wproj_ref[...],
                   preferred_element_type=jnp.float32)
    x1 = x + proj + bproj_ref[...].astype(jnp.float32)     # residual 1

    # ---- norm2 + MLP ----
    xn2 = _layernorm_f32(x1, g2_ref[...].astype(jnp.float32),
                         b2_ref[...].astype(jnp.float32))
    h1 = jnp.dot(xn2.astype(wdt), wfc1_ref[...],
                 preferred_element_type=jnp.float32) + bfc1_ref[...].astype(jnp.float32)
    a = _gelu_tanh(h1)
    h2 = jnp.dot(a.astype(wdt), wfc2_ref[...],
                 preferred_element_type=jnp.float32) + bfc2_ref[...].astype(jnp.float32)

    out_ref[0] = (x1 + h2).astype(out_ref.dtype)           # residual 2


def _padded_bytes(shape, itemsize):
    """Approximate VMEM footprint of a tile after (8, 128) padding."""
    s = list(shape)
    s[-1] = ((s[-1] + 127) // 128) * 128
    if len(s) >= 2:
        s[-2] = ((s[-2] + 7) // 8) * 8
    n = 1
    for d in s:
        n *= d
    return n * itemsize


def block_sepqkv_forward(x, params, *, num_heads):
    B, N, C = x.shape
    assert C % num_heads == 0
    hd = C // num_heads
    Hm = params["wfc1"].shape[1]
    scale = hd ** (-0.5)

    kernel = functools.partial(block_kernel, num_heads=num_heads, scale=scale)

    args = (x,
            params["gamma1"], params["beta1"],
            params["wqkv"], params["wproj"], params["bproj"],
            params["gamma2"], params["beta2"],
            params["wfc1"], params["bfc1"], params["wfc2"], params["bfc2"])

    block_shapes = [
        (1, N, C),        # x
        (1, C), (1, C),   # gamma1, beta1
        (C, 3 * C),       # wqkv (fused, lane-dense)
        (C, C),           # wproj
        (1, C),           # bproj
        (1, C), (1, C),   # gamma2, beta2
        (C, Hm), (1, Hm), # fc1 weight / bias
        (Hm, C), (1, C),  # fc2 weight / bias
    ]
    in_specs = [pl.BlockSpec((1, N, C), lambda b: (b, 0, 0))] + [
        pl.BlockSpec(bs, lambda b: tuple(0 for _ in bs))
        for bs in block_shapes[1:]
    ]
    out_spec = pl.BlockSpec((1, N, C), lambda b: (b, 0, 0))

    # ---- VMEM budget (accounts for the implicit 2x double-buffering of every
    # blocked input/output and the (8,128) padding of small tiles). ----
    itemsize = x.dtype.itemsize
    in_bytes = sum(_padded_bytes(bs, a.dtype.itemsize)
                   for bs, a in zip(block_shapes, args))
    out_bytes = _padded_bytes((1, N, C), itemsize)
    scratch_bytes = _padded_bytes((N, C), 4)
    # f32 intermediates: xn1, qkv(3C), scores+probs, x1, xn2, h1+a, h2, slack.
    inter_bytes = 4 * (8 * N * C + 3 * N * C + 3 * N * N + 3 * N * Hm)
    needed = 2 * (in_bytes + out_bytes) + scratch_bytes + inter_bytes

    try:
        cap = int(pltpu.get_tpu_info().vmem_capacity_bytes)
    except Exception:
        cap = 64 * 1024 * 1024        # conservative fallback (v7x physical)
    vmem_limit = int(min(int(0.85 * cap),
                         max(int(1.5 * needed), 32 * 1024 * 1024)))

    flops = int(B * (8 * N * C * C + 4 * N * N * C + 4 * N * C * Hm))
    transcendentals = int(B * (num_heads * N * N + num_heads * N + N * Hm + 2 * N))
    bytes_accessed = int(2 * B * N * C * itemsize
                         + sum(int(a.size) * a.dtype.itemsize for a in args[1:]))

    return pl.pallas_call(
        kernel,
        out_shape=jax.ShapeDtypeStruct((B, N, C), x.dtype),
        grid_spec=pltpu.PrefetchScalarGridSpec(
            num_scalar_prefetch=0,
            grid=(B,),
            in_specs=in_specs,
            out_specs=out_spec,
            scratch_shapes=[pltpu.VMEM((N, C), jnp.float32)],   # attn output buffer
        ),
        compiler_params=pltpu.CompilerParams(
            dimension_semantics=("parallel",),
            vmem_limit_bytes=vmem_limit),
        cost_estimate=pl.CostEstimate(flops=flops,
                                      transcendentals=transcendentals,
                                      bytes_accessed=bytes_accessed),
    )(*args)


def prepare_params(num_heads, wq, wk, wv, wp, bp, g1, b1, g2, b2,
                   wfc1, bfc1, wfc2, bfc2, *, mxu_dtype=jnp.bfloat16):
    """Re-layout torch (out, in) linear weights for the kernel:
      - transpose to (in, out) so the kernel computes y = x @ W
      - fuse q|k|v along the output axis -> one lane-dense (C, 3C) matmul
      - pre-cast the MXU weight operands to mxu_dtype (bf16 recommended on
        v5e/v6e/v7x; accumulation stays f32). LN params / biases stay f32."""
    C = wq.shape[1]
    Hm = wfc1.shape[0]
    wqkv = jnp.concatenate([wq.T, wk.T, wv.T], axis=1).astype(mxu_dtype)   # (C, 3C)
    return dict(
        gamma1=g1.reshape(1, C).astype(jnp.float32),
        beta1=b1.reshape(1, C).astype(jnp.float32),
        wqkv=wqkv,
        wproj=wp.T.astype(mxu_dtype),                                      # (C, C)
        bproj=bp.reshape(1, C).astype(jnp.float32),
        gamma2=g2.reshape(1, C).astype(jnp.float32),
        beta2=b2.reshape(1, C).astype(jnp.float32),
        wfc1=wfc1.T.astype(mxu_dtype), bfc1=bfc1.reshape(1, Hm).astype(jnp.float32),
        wfc2=wfc2.T.astype(mxu_dtype), bfc2=bfc2.reshape(1, C).astype(jnp.float32),
    )


def reference_forward(x, num_heads, wq, wk, wv, wp, bp, g1, b1, g2, b2,
                      wfc1, bfc1, wfc2, bfc2, *, mxu_dtype=None):
    """Pure-JAX mirror of the PyTorch BlockSepQKV forward.  If mxu_dtype is
    given, matmul operands are cast to it (f32 accumulation), mirroring the
    kernel's bf16-MXU mode so the comparison stays tight."""
    B, N, C = x.shape
    hd = C // num_heads
    scale = hd ** (-0.5)

    def mm(a, b):
        if mxu_dtype is not None:
            a = a.astype(mxu_dtype)
            b = b.astype(mxu_dtype)
        return jnp.matmul(a, b, preferred_element_type=jnp.float32)

    def ln(t, g, b):
        m = t.mean(-1, keepdims=True)
        v = ((t - m) ** 2).mean(-1, keepdims=True)
        return (t - m) / jnp.sqrt(v + LN_EPS) * g + b

    xn1 = ln(x, g1, b1)
    q = mm(xn1, wq.T).reshape(B, N, num_heads, hd).transpose(0, 2, 1, 3)
    k = mm(xn1, wk.T).reshape(B, N, num_heads, hd).transpose(0, 2, 1, 3)
    v = mm(xn1, wv.T).reshape(B, N, num_heads, hd).transpose(0, 2, 1, 3)
    attn = mm(q, k.transpose(0, 1, 3, 2)) * scale
    attn = jax.nn.softmax(attn, axis=-1)
    o = mm(attn, v).transpose(0, 2, 1, 3).reshape(B, N, C)
    x1 = x + mm(o, wp.T) + bp
    xn2 = ln(x1, g2, b2)
    h1 = mm(xn2, wfc1.T) + bfc1
    a = _gelu_tanh(h1)
    return x1 + mm(a, wfc2.T) + bfc2


if __name__ == "__main__":
    # Small, module-consistent shapes: B=2, N=8 tokens, C=32 channels, 4 heads,
    # mlp_ratio=4 -> hidden 128.  (Real ViT sizes with C a multiple of 128 give
    # lane-dense tiles; these sizes are for correctness only.)
    B, N, C = 2, 8, 32
    num_heads = 4
    Hm = 4 * C

    key = jax.random.PRNGKey(0)
    ks = jax.random.split(key, 14)

    x = jax.random.normal(ks[0], (B, N, C), dtype=jnp.float32)

    # nn.Linear stores weight as (out, in); qkv_bias=False per the module default.
    wq = jax.random.normal(ks[1], (C, C), jnp.float32) * 0.05
    wk = jax.random.normal(ks[2], (C, C), jnp.float32) * 0.05
    wv = jax.random.normal(ks[3], (C, C), jnp.float32) * 0.05
    wp = jax.random.normal(ks[4], (C, C), jnp.float32) * 0.05
    bp = jax.random.normal(ks[5], (C,), jnp.float32) * 0.02
    g1 = 1.0 + 0.1 * jax.random.normal(ks[6], (C,), jnp.float32)
    b1 = 0.05 * jax.random.normal(ks[7], (C,), jnp.float32)
    g2 = 1.0 + 0.1 * jax.random.normal(ks[8], (C,), jnp.float32)
    b2 = 0.05 * jax.random.normal(ks[9], (C,), jnp.float32)
    wfc1 = jax.random.normal(ks[10], (Hm, C), jnp.float32) * 0.05
    bfc1 = jax.random.normal(ks[11], (Hm,), jnp.float32) * 0.02
    wfc2 = jax.random.normal(ks[12], (C, Hm), jnp.float32) * 0.05
    bfc2 = jax.random.normal(ks[13], (C,), jnp.float32) * 0.02

    raw = (wq, wk, wv, wp, bp, g1, b1, g2, b2, wfc1, bfc1, wfc2, bfc2)

    # --- f32-weight path vs. pure-f32 reference.  Tolerance covers the EUP
    # approximate reciprocal in softmax and differing MXU f32-matmul pass
    # counts between Mosaic and XLA's default TPU matmul precision. ---
    params_f32 = prepare_params(num_heads, *raw, mxu_dtype=jnp.float32)
    out_f32 = jax.block_until_ready(
        block_sepqkv_forward(x, params_f32, num_heads=num_heads))
    ref_f32 = reference_forward(x, num_heads, *raw)
    assert out_f32.shape == (B, N, C)
    err32 = float(jnp.max(jnp.abs(out_f32 - ref_f32)))
    assert jnp.allclose(out_f32, ref_f32, atol=1e-2, rtol=1e-2), \
        f"f32 mismatch, max err={err32}"

    # --- bf16-MXU path (recommended deployment mode) vs. a reference that
    # casts matmul operands identically; remaining diff is the approximate
    # reciprocal + accumulation order. ---
    params_bf16 = prepare_params(num_heads, *raw, mxu_dtype=jnp.bfloat16)
    out_bf16 = jax.block_until_ready(
        block_sepqkv_forward(x, params_bf16, num_heads=num_heads))
    ref_bf16 = reference_forward(x, num_heads, *raw, mxu_dtype=jnp.bfloat16)
    errbf = float(jnp.max(jnp.abs(out_bf16 - ref_bf16)))
    assert jnp.allclose(out_bf16, ref_bf16, atol=1e-2, rtol=1e-2), \
        f"bf16 mismatch, max err={errbf}"

    print("KERNEL_OK")
</pallas_src>

<mosaic_0001>
module attributes {stable_mosaic.version = 11 : i64} {
  func.func @block_kernel(%arg0: i32, %arg1: memref<1x8x32xf32, #tpu.memory_space<vmem>>, %arg2: memref<1x32xf32, #tpu.memory_space<vmem>>, %arg3: memref<1x32xf32, #tpu.memory_space<vmem>>, %arg4: memref<32x96xf32, #tpu.memory_space<vmem>>, %arg5: memref<32x32xf32, #tpu.memory_space<vmem>>, %arg6: memref<1x32xf32, #tpu.memory_space<vmem>>, %arg7: memref<1x32xf32, #tpu.memory_space<vmem>>, %arg8: memref<1x32xf32, #tpu.memory_space<vmem>>, %arg9: memref<32x128xf32, #tpu.memory_space<vmem>>, %arg10: memref<1x128xf32, #tpu.memory_space<vmem>>, %arg11: memref<128x32xf32, #tpu.memory_space<vmem>>, %arg12: memref<1x32xf32, #tpu.memory_space<vmem>>, %arg13: memref<1x8x32xf32, #tpu.memory_space<vmem>>, %arg14: memref<8x32xf32, #tpu.memory_space<vmem>>) attributes {dimension_semantics = [#tpu.dimension_semantics<parallel>], iteration_bounds = array<i64: 2>, scalar_prefetch = 0 : i64, scratch_operands = 1 : i64, tpu.core_type = #tpu.core_type<tc>, window_params = [{transform_indices = @transform_0, window_bounds = array<i64: 1, 8, 32>}, {pipeline_mode = #tpu.pipeline_mode<synchronous>, transform_indices = @transform_1, window_bounds = array<i64: 1, 32>}, {pipeline_mode = #tpu.pipeline_mode<synchronous>, transform_indices = @transform_2, window_bounds = array<i64: 1, 32>}, {pipeline_mode = #tpu.pipeline_mode<synchronous>, transform_indices = @transform_3, window_bounds = array<i64: 32, 96>}, {pipeline_mode = #tpu.pipeline_mode<synchronous>, transform_indices = @transform_4, window_bounds = array<i64: 32, 32>}, {pipeline_mode = #tpu.pipeline_mode<synchronous>, transform_indices = @transform_5, window_bounds = array<i64: 1, 32>}, {pipeline_mode = #tpu.pipeline_mode<synchronous>, transform_indices = @transform_6, window_bounds = array<i64: 1, 32>}, {pipeline_mode = #tpu.pipeline_mode<synchronous>, transform_indices = @transform_7, window_bounds = array<i64: 1, 32>}, {pipeline_mode = #tpu.pipeline_mode<synchronous>, transform_indices = @transform_8, window_bounds = array<i64: 32, 128>}, {pipeline_mode = #tpu.pipeline_mode<synchronous>, transform_indices = @transform_9, window_bounds = array<i64: 1, 128>}, {pipeline_mode = #tpu.pipeline_mode<synchronous>, transform_indices = @transform_10, window_bounds = array<i64: 128, 32>}, {pipeline_mode = #tpu.pipeline_mode<synchronous>, transform_indices = @transform_11, window_bounds = array<i64: 1, 32>}, {transform_indices = @transform_12, window_bounds = array<i64: 1, 8, 32>}]} {
    %c0 = arith.constant 0 : index
    %c0_0 = arith.constant 0 : index
    %c0_1 = arith.constant 0 : index
    %0 = vector.load %arg1[%c0, %c0_0, %c0_1] : memref<1x8x32xf32, #tpu.memory_space<vmem>>, vector<1x8x32xf32>
    %1 = vector.shape_cast %0 : vector<1x8x32xf32> to vector<8x32xf32>
    %c0_2 = arith.constant 0 : index
    %c0_3 = arith.constant 0 : index
    %2 = vector.load %arg2[%c0_2, %c0_3] : memref<1x32xf32, #tpu.memory_space<vmem>>, vector<1x32xf32>
    %c0_4 = arith.constant 0 : index
    %c0_5 = arith.constant 0 : index
    %3 = vector.load %arg3[%c0_4, %c0_5] : memref<1x32xf32, #tpu.memory_space<vmem>>, vector<1x32xf32>
    %cst = arith.constant dense<0.000000e+00> : vector<8xf32>
    %4 = vector.multi_reduction <add>, %1, %cst [1] : vector<8x32xf32> to vector<8xf32>
    %5 = vector.shape_cast %4 : vector<8xf32> to vector<8x1xf32>
    %cst_6 = arith.constant 3.200000e+01 : f32
    %6 = vector.broadcast %cst_6 : f32 to vector<8x1xf32>
    %7 = arith.divf %5, %6 : vector<8x1xf32>
    %8 = vector.broadcast %7 : vector<8x1xf32> to vector<8x32xf32>
    %9 = arith.subf %1, %8 : vector<8x32xf32>
    %10 = arith.mulf %9, %9 : vector<8x32xf32>
    %cst_7 = arith.constant dense<0.000000e+00> : vector<8xf32>
    %11 = vector.multi_reduction <add>, %10, %cst_7 [1] : vector<8x32xf32> to vector<8xf32>
    %12 = vector.shape_cast %11 : vector<8xf32> to vector<8x1xf32>
    %cst_8 = arith.constant 3.200000e+01 : f32
    %13 = vector.broadcast %cst_8 : f32 to vector<8x1xf32>
    %14 = arith.divf %12, %13 : vector<8x1xf32>
    %cst_9 = arith.constant 9.99999974E-6 : f32
    %15 = vector.broadcast %cst_9 : f32 to vector<8x1xf32>
    %16 = arith.addf %14, %15 : vector<8x1xf32>
    %17 = math.rsqrt %16 : vector<8x1xf32>
    %18 = vector.broadcast %17 : vector<8x1xf32> to vector<8x32xf32>
    %19 = arith.mulf %9, %18 : vector<8x32xf32>
    %20 = vector.broadcast %2 : vector<1x32xf32> to vector<8x32xf32>
    %21 = arith.mulf %19, %20 : vector<8x32xf32>
    %22 = vector.broadcast %3 : vector<1x32xf32> to vector<8x32xf32>
    %23 = arith.addf %21, %22 : vector<8x32xf32>
    %c0_10 = arith.constant 0 : index
    %c0_11 = arith.constant 0 : index
    %24 = vector.load %arg4[%c0_10, %c0_11] : memref<32x96xf32, #tpu.memory_space<vmem>>, vector<32x96xf32>
    %cst_12 = arith.constant dense<0.000000e+00> : vector<8x96xf32>
    %25 = tpu.matmul %23, %24, %cst_12 {dimension_numbers = #tpu.dot_dimension_numbers<[1], [0], [0], [1], [0, 0, 1, 1], [], []>} : vector<8x32xf32>, vector<32x96xf32>, vector<8x96xf32> -> vector<8x96xf32>
    %26 = vector.extract_strided_slice %25 {offsets = [0, 0], sizes = [8, 8], strides = [1, 1]} : vector<8x96xf32> to vector<8x8xf32>
    %27 = vector.extract_strided_slice %25 {offsets = [0, 32], sizes = [8, 8], strides = [1, 1]} : vector<8x96xf32> to vector<8x8xf32>
    %28 = vector.extract_strided_slice %25 {offsets = [0, 64], sizes = [8, 8], strides = [1, 1]} : vector<8x96xf32> to vector<8x8xf32>
    %cst_13 = arith.constant dense<0.000000e+00> : vector<8x8xf32>
    %29 = tpu.matmul %26, %27, %cst_13 {dimension_numbers = #tpu.dot_dimension_numbers<[1], [1], [0], [0], [0, 0, 1, 0], [], []>} : vector<8x8xf32>, vector<8x8xf32>, vector<8x8xf32> -> vector<8x8xf32>
    %cst_14 = arith.constant 0.353553385 : f32
    %30 = vector.broadcast %cst_14 : f32 to vector<8x8xf32>
    %31 = arith.mulf %29, %30 : vector<8x8xf32>
    %cst_15 = arith.constant dense<0xFF800000> : vector<8xf32>
    %32 = vector.multi_reduction <maximumf>, %31, %cst_15 [1] : vector<8x8xf32> to vector<8xf32>
    %33 = vector.shape_cast %32 : vector<8xf32> to vector<8x1xf32>
    %34 = vector.broadcast %33 : vector<8x1xf32> to vector<8x8xf32>
    %35 = arith.subf %31, %34 : vector<8x8xf32>
    %36 = math.exp %35 : vector<8x8xf32>
    %cst_16 = arith.constant dense<0.000000e+00> : vector<8xf32>
    %37 = vector.multi_reduction <add>, %36, %cst_16 [1] : vector<8x8xf32> to vector<8xf32>
    %38 = vector.shape_cast %37 : vector<8xf32> to vector<8x1xf32>
    %39 = tpu.reciprocal %38 {approx = true} : vector<8x1xf32> -> vector<8x1xf32>
    %40 = vector.broadcast %39 : vector<8x1xf32> to vector<8x8xf32>
    %41 = arith.mulf %36, %40 : vector<8x8xf32>
    %cst_17 = arith.constant dense<0.000000e+00> : vector<8x8xf32>
    %42 = tpu.matmul %41, %28, %cst_17 {dimension_numbers = #tpu.dot_dimension_numbers<[1], [0], [0], [1], [0, 0, 1, 1], [], []>} : vector<8x8xf32>, vector<8x8xf32>, vector<8x8xf32> -> vector<8x8xf32>
    %c0_18 = arith.constant 0 : index
    %c0_19 = arith.constant 0 : index
    %43 = vector.load %arg14[%c0_18, %c0_19] : memref<8x32xf32, #tpu.memory_space<vmem>>, vector<8x8xf32>
    tpu.vector_store %arg14[%c0_18, %c0_19], %42 {strides = array<i32>} : memref<8x32xf32, #tpu.memory_space<vmem>>, vector<8x8xf32>,
    %44 = vector.extract_strided_slice %25 {offsets = [0, 8], sizes = [8, 8], strides = [1, 1]} : vector<8x96xf32> to vector<8x8xf32>
    %45 = vector.extract_strided_slice %25 {offsets = [0, 40], sizes = [8, 8], strides = [1, 1]} : vector<8x96xf32> to vector<8x8xf32>
    %46 = vector.extract_strided_slice %25 {offsets = [0, 72], sizes = [8, 8], strides = [1, 1]} : vector<8x96xf32> to vector<8x8xf32>
    %cst_20 = arith.constant dense<0.000000e+00> : vector<8x8xf32>
    %47 = tpu.matmul %44, %45, %cst_20 {dimension_numbers = #tpu.dot_dimension_numbers<[1], [1], [0], [0], [0, 0, 1, 0], [], []>} : vector<8x8xf32>, vector<8x8xf32>, vector<8x8xf32> -> vector<8x8xf32>
    %cst_21 = arith.constant 0.353553385 : f32
    %48 = vector.broadcast %cst_21 : f32 to vector<8x8xf32>
    %49 = arith.mulf %47, %48 : vector<8x8xf32>
    %cst_22 = arith.constant dense<0xFF800000> : vector<8xf32>
    %50 = vector.multi_reduction <maximumf>, %49, %cst_22 [1] : vector<8x8xf32> to vector<8xf32>
    %51 = vector.shape_cast %50 : vector<8xf32> to vector<8x1xf32>
    %52 = vector.broadcast %51 : vector<8x1xf32> to vector<8x8xf32>
    %53 = arith.subf %49, %52 : vector<8x8xf32>
    %54 = math.exp %53 : vector<8x8xf32>
    %cst_23 = arith.constant dense<0.000000e+00> : vector<8xf32>
    %55 = vector.multi_reduction <add>, %54, %cst_23 [1] : vector<8x8xf32> to vector<8xf32>
    %56 = vector.shape_cast %55 : vector<8xf32> to vector<8x1xf32>
    %57 = tpu.reciprocal %56 {approx = true} : vector<8x1xf32> -> vector<8x1xf32>
    %58 = vector.broadcast %57 : vector<8x1xf32> to vector<8x8xf32>
    %59 = arith.mulf %54, %58 : vector<8x8xf32>
    %cst_24 = arith.constant dense<0.000000e+00> : vector<8x8xf32>
    %60 = tpu.matmul %59, %46, %cst_24 {dimension_numbers = #tpu.dot_dimension_numbers<[1], [0], [0], [1], [0, 0, 1, 1], [], []>} : vector<8x8xf32>, vector<8x8xf32>, vector<8x8xf32> -> vector<8x8xf32>
    %c0_25 = arith.constant 0 : index
    %c8 = arith.constant 8 : index
    %61 = vector.load %arg14[%c0_25, %c8] : memref<8x32xf32, #tpu.memory_space<vmem>>, vector<8x8xf32>
    tpu.vector_store %arg14[%c0_25, %c8], %60 {strides = array<i32>} : memref<8x32xf32, #tpu.memory_space<vmem>>, vector<8x8xf32>,
    %62 = vector.extract_strided_slice %25 {offsets = [0, 16], sizes = [8, 8], strides = [1, 1]} : vector<8x96xf32> to vector<8x8xf32>
    %63 = vector.extract_strided_slice %25 {offsets = [0, 48], sizes = [8, 8], strides = [1, 1]} : vector<8x96xf32> to vector<8x8xf32>
    %64 = vector.extract_strided_slice %25 {offsets = [0, 80], sizes = [8, 8], strides = [1, 1]} : vector<8x96xf32> to vector<8x8xf32>
    %cst_26 = arith.constant dense<0.000000e+00> : vector<8x8xf32>
    %65 = tpu.matmul %62, %63, %cst_26 {dimension_numbers = #tpu.dot_dimension_numbers<[1], [1], [0], [0], [0, 0, 1, 0], [], []>} : vector<8x8xf32>, vector<8x8xf32>, vector<8x8xf32> -> vector<8x8xf32>
    %cst_27 = arith.constant 0.353553385 : f32
    %66 = vector.broadcast %cst_27 : f32 to vector<8x8xf32>
    %67 = arith.mulf %65, %66 : vector<8x8xf32>
    %cst_28 = arith.constant dense<0xFF800000> : vector<8xf32>
    %68 = vector.multi_reduction <maximumf>, %67, %cst_28 [1] : vector<8x8xf32> to vector<8xf32>
    %69 = vector.shape_cast %68 : vector<8xf32> to vector<8x1xf32>
    %70 = vector.broadcast %69 : vector<8x1xf32> to vector<8x8xf32>
    %71 = arith.subf %67, %70 : vector<8x8xf32>
    %72 = math.exp %71 : vector<8x8xf32>
    %cst_29 = arith.constant dense<0.000000e+00> : vector<8xf32>
    %73 = vector.multi_reduction <add>, %72, %cst_29 [1] : vector<8x8xf32> to vector<8xf32>
    %74 = vector.shape_cast %73 : vector<8xf32> to vector<8x1xf32>
    %75 = tpu.reciprocal %74 {approx = true} : vector<8x1xf32> -> vector<8x1xf32>
    %76 = vector.broadcast %75 : vector<8x1xf32> to vector<8x8xf32>
    %77 = arith.mulf %72, %76 : vector<8x8xf32>
    %cst_30 = arith.constant dense<0.000000e+00> : vector<8x8xf32>
    %78 = tpu.matmul %77, %64, %cst_30 {dimension_numbers = #tpu.dot_dimension_numbers<[1], [0], [0], [1], [0, 0, 1, 1], [], []>} : vector<8x8xf32>, vector<8x8xf32>, vector<8x8xf32> -> vector<8x8xf32>
    %c0_31 = arith.constant 0 : index
    %c16 = arith.constant 16 : index
    %79 = vector.load %arg14[%c0_31, %c16] : memref<8x32xf32, #tpu.memory_space<vmem>>, vector<8x8xf32>
    tpu.vector_store %arg14[%c0_31, %c16], %78 {strides = array<i32>} : memref<8x32xf32, #tpu.memory_space<vmem>>, vector<8x8xf32>,
    %80 = vector.extract_strided_slice %25 {offsets = [0, 24], sizes = [8, 8], strides = [1, 1]} : vector<8x96xf32> to vector<8x8xf32>
    %81 = vector.extract_strided_slice %25 {offsets = [0, 56], sizes = [8, 8], strides = [1, 1]} : vector<8x96xf32> to vector<8x8xf32>
    %82 = vector.extract_strided_slice %25 {offsets = [0, 88], sizes = [8, 8], strides = [1, 1]} : vector<8x96xf32> to vector<8x8xf32>
    %cst_32 = arith.constant dense<0.000000e+00> : vector<8x8xf32>
    %83 = tpu.matmul %80, %81, %cst_32 {dimension_numbers = #tpu.dot_dimension_numbers<[1], [1], [0], [0], [0, 0, 1, 0], [], []>} : vector<8x8xf32>, vector<8x8xf32>, vector<8x8xf32> -> vector<8x8xf32>
    %cst_33 = arith.constant 0.353553385 : f32
    %84 = vector.broadcast %cst_33 : f32 to vector<8x8xf32>
    %85 = arith.mulf %83, %84 : vector<8x8xf32>
    %cst_34 = arith.constant dense<0xFF800000> : vector<8xf32>
    %86 = vector.multi_reduction <maximumf>, %85, %cst_34 [1] : vector<8x8xf32> to vector<8xf32>
    %87 = vector.shape_cast %86 : vector<8xf32> to vector<8x1xf32>
    %88 = vector.broadcast %87 : vector<8x1xf32> to vector<8x8xf32>
    %89 = arith.subf %85, %88 : vector<8x8xf32>
    %90 = math.exp %89 : vector<8x8xf32>
    %cst_35 = arith.constant dense<0.000000e+00> : vector<8xf32>
    %91 = vector.multi_reduction <add>, %90, %cst_35 [1] : vector<8x8xf32> to vector<8xf32>
    %92 = vector.shape_cast %91 : vector<8xf32> to vector<8x1xf32>
    %93 = tpu.reciprocal %92 {approx = true} : vector<8x1xf32> -> vector<8x1xf32>
    %94 = vector.broadcast %93 : vector<8x1xf32> to vector<8x8xf32>
    %95 = arith.mulf %90, %94 : vector<8x8xf32>
    %cst_36 = arith.constant dense<0.000000e+00> : vector<8x8xf32>
    %96 = tpu.matmul %95, %82, %cst_36 {dimension_numbers = #tpu.dot_dimension_numbers<[1], [0], [0], [1], [0, 0, 1, 1], [], []>} : vector<8x8xf32>, vector<8x8xf32>, vector<8x8xf32> -> vector<8x8xf32>
    %c0_37 = arith.constant 0 : index
    %c24 = arith.constant 24 : index
    %97 = vector.load %arg14[%c0_37, %c24] : memref<8x32xf32, #tpu.memory_space<vmem>>, vector<8x8xf32>
    tpu.vector_store %arg14[%c0_37, %c24], %96 {strides = array<i32>} : memref<8x32xf32, #tpu.memory_space<vmem>>, vector<8x8xf32>,
    %c0_38 = arith.constant 0 : index
    %c0_39 = arith.constant 0 : index
    %98 = vector.load %arg14[%c0_38, %c0_39] : memref<8x32xf32, #tpu.memory_space<vmem>>, vector<8x32xf32>
    %c0_40 = arith.constant 0 : index
    %c0_41 = arith.constant 0 : index
    %99 = vector.load %arg5[%c0_40, %c0_41] : memref<32x32xf32, #tpu.memory_space<vmem>>, vector<32x32xf32>
    %cst_42 = arith.constant dense<0.000000e+00> : vector<8x32xf32>
    %100 = tpu.matmul %98, %99, %cst_42 {dimension_numbers = #tpu.dot_dimension_numbers<[1], [0], [0], [1], [0, 0, 1, 1], [], []>} : vector<8x32xf32>, vector<32x32xf32>, vector<8x32xf32> -> vector<8x32xf32>
    %101 = arith.addf %1, %100 : vector<8x32xf32>
    %c0_43 = arith.constant 0 : index
    %c0_44 = arith.constant 0 : index
    %102 = vector.load %arg6[%c0_43, %c0_44] : memref<1x32xf32, #tpu.memory_space<vmem>>, vector<1x32xf32>
    %103 = vector.broadcast %102 : vector<1x32xf32> to vector<8x32xf32>
    %104 = arith.addf %101, %103 : vector<8x32xf32>
    %c0_45 = arith.constant 0 : index
    %c0_46 = arith.constant 0 : index
    %105 = vector.load %arg7[%c0_45, %c0_46] : memref<1x32xf32, #tpu.memory_space<vmem>>, vector<1x32xf32>
    %c0_47 = arith.constant 0 : index
    %c0_48 = arith.constant 0 : index
    %106 = vector.load %arg8[%c0_47, %c0_48] : memref<1x32xf32, #tpu.memory_space<vmem>>, vector<1x32xf32>
    %cst_49 = arith.constant dense<0.000000e+00> : vector<8xf32>
    %107 = vector.multi_reduction <add>, %104, %cst_49 [1] : vector<8x32xf32> to vector<8xf32>
    %108 = vector.shape_cast %107 : vector<8xf32> to vector<8x1xf32>
    %cst_50 = arith.constant 3.200000e+01 : f32
    %109 = vector.broadcast %cst_50 : f32 to vector<8x1xf32>
    %110 = arith.divf %108, %109 : vector<8x1xf32>
    %111 = vector.broadcast %110 : vector<8x1xf32> to vector<8x32xf32>
    %112 = arith.subf %104, %111 : vector<8x32xf32>
    %113 = arith.mulf %112, %112 : vector<8x32xf32>
    %cst_51 = arith.constant dense<0.000000e+00> : vector<8xf32>
    %114 = vector.multi_reduction <add>, %113, %cst_51 [1] : vector<8x32xf32> to vector<8xf32>
    %115 = vector.shape_cast %114 : vector<8xf32> to vector<8x1xf32>
    %cst_52 = arith.constant 3.200000e+01 : f32
    %116 = vector.broadcast %cst_52 : f32 to vector<8x1xf32>
    %117 = arith.divf %115, %116 : vector<8x1xf32>
    %cst_53 = arith.constant 9.99999974E-6 : f32
    %118 = vector.broadcast %cst_53 : f32 to vector<8x1xf32>
    %119 = arith.addf %117, %118 : vector<8x1xf32>
    %120 = math.rsqrt %119 : vector<8x1xf32>
    %121 = vector.broadcast %120 : vector<8x1xf32> to vector<8x32xf32>
    %122 = arith.mulf %112, %121 : vector<8x32xf32>
    %123 = vector.broadcast %105 : vector<1x32xf32> to vector<8x32xf32>
    %124 = arith.mulf %122, %123 : vector<8x32xf32>
    %125 = vector.broadcast %106 : vector<1x32xf32> to vector<8x32xf32>
    %126 = arith.addf %124, %125 : vector<8x32xf32>
    %c0_54 = arith.constant 0 : index
    %c0_55 = arith.constant 0 : index
    %127 = vector.load %arg9[%c0_54, %c0_55] : memref<32x128xf32, #tpu.memory_space<vmem>>, vector<32x128xf32>
    %cst_56 = arith.constant dense<0.000000e+00> : vector<8x128xf32>
    %128 = tpu.matmul %126, %127, %cst_56 {dimension_numbers = #tpu.dot_dimension_numbers<[1], [0], [0], [1], [0, 0, 1, 1], [], []>} : vector<8x32xf32>, vector<32x128xf32>, vector<8x128xf32> -> vector<8x128xf32>
    %c0_57 = arith.constant 0 : index
    %c0_58 = arith.constant 0 : index
    %129 = vector.load %arg10[%c0_57, %c0_58] : memref<1x128xf32, #tpu.memory_space<vmem>>, vector<1x128xf32>
    %130 = vector.broadcast %129 : vector<1x128xf32> to vector<8x128xf32>
    %131 = arith.addf %128, %130 : vector<8x128xf32>
    %cst_59 = arith.constant 5.000000e-01 : f32
    %132 = vector.broadcast %cst_59 : f32 to vector<8x128xf32>
    %133 = arith.mulf %132, %131 : vector<8x128xf32>
    %cst_60 = arith.constant 4.471500e-02 : f32
    %134 = vector.broadcast %cst_60 : f32 to vector<8x128xf32>
    %135 = arith.mulf %134, %131 : vector<8x128xf32>
    %136 = arith.mulf %135, %131 : vector<8x128xf32>
    %137 = arith.mulf %136, %131 : vector<8x128xf32>
    %138 = arith.addf %131, %137 : vector<8x128xf32>
    %cst_61 = arith.constant 0.797884583 : f32
    %139 = vector.broadcast %cst_61 : f32 to vector<8x128xf32>
    %140 = arith.mulf %139, %138 : vector<8x128xf32>
    %141 = math.tanh %140 : vector<8x128xf32>
    %cst_62 = arith.constant 1.000000e+00 : f32
    %142 = vector.broadcast %cst_62 : f32 to vector<8x128xf32>
    %143 = arith.addf %142, %141 : vector<8x128xf32>
    %144 = arith.mulf %133, %143 : vector<8x128xf32>
    %c0_63 = arith.constant 0 : index
    %c0_64 = arith.constant 0 : index
    %145 = vector.load %arg11[%c0_63, %c0_64] : memref<128x32xf32, #tpu.memory_space<vmem>>, vector<128x32xf32>
    %cst_65 = arith.constant dense<0.000000e+00> : vector<8x32xf32>
    %146 = tpu.matmul %144, %145, %cst_65 {dimension_numbers = #tpu.dot_dimension_numbers<[1], [0], [0], [1], [0, 0, 1, 1], [], []>} : vector<8x128xf32>, vector<128x32xf32>, vector<8x32xf32> -> vector<8x32xf32>
    %c0_66 = arith.constant 0 : index
    %c0_67 = arith.constant 0 : index
    %147 = vector.load %arg12[%c0_66, %c0_67] : memref<1x32xf32, #tpu.memory_space<vmem>>, vector<1x32xf32>
    %148 = vector.broadcast %147 : vector<1x32xf32> to vector<8x32xf32>
    %149 = arith.addf %146, %148 : vector<8x32xf32>
    %150 = arith.addf %104, %149 : vector<8x32xf32>
    %c0_68 = arith.constant 0 : index
    %c0_69 = arith.constant 0 : index
    %c0_70 = arith.constant 0 : index
    %151 = vector.load %arg13[%c0_68, %c0_69, %c0_70] : memref<1x8x32xf32, #tpu.memory_space<vmem>>, vector<1x8x32xf32>
    %152 = vector.shape_cast %151 : vector<1x8x32xf32> to vector<8x32xf32>
    %153 = vector.shape_cast %150 : vector<8x32xf32> to vector<1x8x32xf32>
    tpu.vector_store %arg13[%c0_68, %c0_69, %c0_70], %153 {strides = array<i32>} : memref<1x8x32xf32, #tpu.memory_space<vmem>>, vector<1x8x32xf32>,
    return
  }
  func.func @transform_0(%arg0: i32) -> (i32, i32, i32) {
    %c0_i32 = arith.constant 0 : i32
    %c0_i32_0 = arith.constant 0 : i32
    %c0_i32_1 = arith.constant 0 : i32
    return %arg0, %c0_i32, %c0_i32_0 : i32, i32, i32
  }
  func.func @transform_1(%arg0: i32) -> (i32, i32) {
    %c0_i32 = arith.constant 0 : i32
    %c0_i32_0 = arith.constant 0 : i32
    %c0_i32_1 = arith.constant 0 : i32
    return %c0_i32, %c0_i32_0 : i32, i32
  }
  func.func @transform_2(%arg0: i32) -> (i32, i32) {
    %c0_i32 = arith.constant 0 : i32
    %c0_i32_0 = arith.constant 0 : i32
    %c0_i32_1 = arith.constant 0 : i32
    return %c0_i32, %c0_i32_0 : i32, i32
  }
  func.func @transform_3(%arg0: i32) -> (i32, i32) {
    %c0_i32 = arith.constant 0 : i32
    %c0_i32_0 = arith.constant 0 : i32
    %c0_i32_1 = arith.constant 0 : i32
    return %c0_i32, %c0_i32_0 : i32, i32
  }
  func.func @transform_4(%arg0: i32) -> (i32, i32) {
    %c0_i32 = arith.constant 0 : i32
    %c0_i32_0 = arith.constant 0 : i32
    %c0_i32_1 = arith.constant 0 : i32
    return %c0_i32, %c0_i32_0 : i32, i32
  }
  func.func @transform_5(%arg0: i32) -> (i32, i32) {
    %c0_i32 = arith.constant 0 : i32
    %c0_i32_0 = arith.constant 0 : i32
    %c0_i32_1 = arith.constant 0 : i32
    return %c0_i32, %c0_i32_0 : i32, i32
  }
  func.func @transform_6(%arg0: i32) -> (i32, i32) {
    %c0_i32 = arith.constant 0 : i32
    %c0_i32_0 = arith.constant 0 : i32
    %c0_i32_1 = arith.constant 0 : i32
    return %c0_i32, %c0_i32_0 : i32, i32
  }
  func.func @transform_7(%arg0: i32) -> (i32, i32) {
    %c0_i32 = arith.constant 0 : i32
    %c0_i32_0 = arith.constant 0 : i32
    %c0_i32_1 = arith.constant 0 : i32
    return %c0_i32, %c0_i32_0 : i32, i32
  }
  func.func @transform_8(%arg0: i32) -> (i32, i32) {
    %c0_i32 = arith.constant 0 : i32
    %c0_i32_0 = arith.constant 0 : i32
    %c0_i32_1 = arith.constant 0 : i32
    return %c0_i32, %c0_i32_0 : i32, i32
  }
  func.func @transform_9(%arg0: i32) -> (i32, i32) {
    %c0_i32 = arith.constant 0 : i32
    %c0_i32_0 = arith.constant 0 : i32
    %c0_i32_1 = arith.constant 0 : i32
    return %c0_i32, %c0_i32_0 : i32, i32
  }
  func.func @transform_10(%arg0: i32) -> (i32, i32) {
    %c0_i32 = arith.constant 0 : i32
    %c0_i32_0 = arith.constant 0 : i32
    %c0_i32_1 = arith.constant 0 : i32
    return %c0_i32, %c0_i32_0 : i32, i32
  }
  func.func @transform_11(%arg0: i32) -> (i32, i32) {
    %c0_i32 = arith.constant 0 : i32
    %c0_i32_0 = arith.constant 0 : i32
    %c0_i32_1 = arith.constant 0 : i32
    return %c0_i32, %c0_i32_0 : i32, i32
  }
  func.func @transform_12(%arg0: i32) -> (i32, i32, i32) {
    %c0_i32 = arith.constant 0 : i32
    %c0_i32_0 = arith.constant 0 : i32
    %c0_i32_1 = arith.constant 0 : i32
    return %arg0, %c0_i32, %c0_i32_0 : i32, i32, i32
  }
}

</mosaic_0001>

<llo_original>
// kernel: tpu_custom_call.1
$region0: #{tpu_custom_call.1}
  #allocation0 [shape = 'u32[]', space=smem, size = 0x4, offset = 0x4, fixed_abs, tag = 'smem constant byte address 0x4 - core index']
  #allocation1 [shape = 'u32[144,128]{1,0:T(1,128)}', space=vmem, size = 0x12000, scoped, tag = 'internal scratch']
  #allocation2 [shape = 'f32[8,32]{1,0:T(8,128)}', space=vmem, size = 0x1000, scoped, tag = 'scratch operand']
  %s0 = inlined_call_operand.vmem [shape: f32[2,8,32], index: 0, kind: input, shape index: {}]
  %s1 = inlined_call_operand.vmem [shape: f32[1,32], index: 1, kind: input, shape index: {}]
  %s2 = inlined_call_operand.vmem [shape: f32[1,32], index: 2, kind: input, shape index: {}]
  %s3 = inlined_call_operand.vmem [shape: f32[32,96], index: 3, kind: input, shape index: {}]
  %s4 = inlined_call_operand.vmem [shape: f32[32,32], index: 4, kind: input, shape index: {}]
  %s5 = inlined_call_operand.vmem [shape: f32[1,32], index: 5, kind: input, shape index: {}]
  %s6 = inlined_call_operand.vmem [shape: f32[1,32], index: 6, kind: input, shape index: {}]
  %s7 = inlined_call_operand.vmem [shape: f32[1,32], index: 7, kind: input, shape index: {}]
  %s8 = inlined_call_operand.vmem [shape: f32[32,128], index: 8, kind: input, shape index: {}]
  %s9 = inlined_call_operand.vmem [shape: f32[1,128], index: 9, kind: input, shape index: {}]
  %s10 = inlined_call_operand.vmem [shape: f32[128,32], index: 10, kind: input, shape index: {}]
  %s11 = inlined_call_operand.vmem [shape: f32[1,32], index: 11, kind: input, shape index: {}]
  %s12 = inlined_call_operand.hbm [shape: f32[2,8,32], index: 12, kind: output, shape index: {}]
  %s13 = sld [smem:[#allocation0]]
  $region81: #{tpu_custom_call.1} parent=0
    _
  %s15 = ssub.s32 1, %s13
  %s16 = scalar_select 0, %s15, %s13
  $region1: #{tpu_custom_call.1} parent=0
    #allocation3 [shape = 'u8[8192]{0}', space=vmem, size = 0x2000, scoped, tag = 'output window, operand 0']
    #allocation4 [shape = 's32[2]{0}', space=sflag, size = 0x8, scoped, tag = 'scoped memory for tpu_custom_call.1']
    %17 = vsyncpa [#allocation4], 0
    %s18 = scalar_lea.sflag [#allocation4], 1
    %19 = vsyncpa %s18, 0
    loop: start=0, step=1, limit=4
    $region2: #{tpu_custom_call.1} parent=1 // loop_pre_header
      _
    $region3: #{tpu_custom_call.1} parent=1 // loop_header
      %s21 = sphi 0, %s25
      %p22 = scmp.ge.s32.totalorder %s21, 4
      %s31 = sphi 0, %s33
      %s34 = sphi 0, %s31
      %s35 = sphi 0, %s34
      %s51 = sphi 0, %s35
      %s55 = sphi 0, %s55
      %s57 = sphi 0, %s55
      %s58 = sphi 0, %s57
      %s72 = sphi 0, %s58
      %s76 = sphi 0, %s76
      %s78 = sphi 0, %s76
      %s79 = sphi 0, %s78
      %s93 = sphi 0, %s79
      %s97 = sphi 0, %s97
      %s99 = sphi 0, %s97
      %s100 = sphi 0, %s99
      %s114 = sphi 0, %s100
      %s118 = sphi 0, %s118
      %s120 = sphi 0, %s118
      %s121 = sphi 0, %s120
      %s135 = sphi 0, %s121
      %s139 = sphi 0, %s139
      %s141 = sphi 0, %s139
      %s142 = sphi 0, %s141
      %s156 = sphi 0, %s142
      %s160 = sphi 0, %s160
      %s162 = sphi 0, %s160
      %s163 = sphi 0, %s162
      %s177 = sphi 0, %s163
      %s181 = sphi 0, %s181
      %s183 = sphi 0, %s181
      %s184 = sphi 0, %s183
      %s198 = sphi 0, %s184
      %s202 = sphi 0, %s202
      %s204 = sphi 0, %s202
      %s205 = sphi 0, %s204
      %s219 = sphi 0, %s205
      %s223 = sphi 0, %s223
      %s225 = sphi 0, %s223
      %s226 = sphi 0, %s225
      %s240 = sphi 0, %s226
      %s244 = sphi 0, %s244
      %s246 = sphi 0, %s244
      %s247 = sphi 0, %s246
      %s261 = sphi 0, %s247
      %s265 = sphi 0, %s265
      %s267 = sphi 0, %s265
      %s268 = sphi 0, %s267
      %s282 = sphi 0, %s268
      %s288 = sphi 0, %s290
      %s291 = sphi 0, %s288
      %s292 = sphi 0, %s291
      %s308 = sphi 0, %s292
    $region4: #{tpu_custom_call.1} parent=1 // loop_header_branch
      %24 = sbr.rel (%p22) target = $region8
    $region5: #{tpu_custom_call.1} parent=1 // loop_body
      %s26 = ssub.s32 %s21, 1
      %s27 = ssub.s32 %s21, 2
      %s28 = sadd.s32 %s21, 1
      %s29 = ssub.s32 %s21, %s28
      %p30 = scmp.eq.s32.totalorder %s29, 0
      %s32 = sadd.s32 %s31, 1
      %s33 = scalar_select %p30, %s31, %s32
      %p36 = pneg %p30
      %p37 = scmp.eq.s32.totalorder %s21, 1
      %p38 = por %p36, %p37
      %p39 = scmp.ne.s32.totalorder %s31, %s34
      %p40 = scmp.eq.s32.totalorder %s21, 0
      %p41 = por %p39, %p40
      %p42 = scmp.ne.s32.totalorder %s31, %s34
      %p43 = scmp.eq.s32.totalorder %s26, 1
      %p44 = por %p42, %p43
      %p45 = scmp.ne.s32.totalorder %s34, %s35
      %p46 = scmp.eq.s32.totalorder %s26, 0
      %p47 = por %p45, %p46
      %p48 = scmp.ne.s32.totalorder %s34, %s35
      %p49 = scmp.eq.s32.totalorder %s27, 1
      %p50 = por %p48, %p49
      %p52 = scmp.ne.s32.totalorder %s35, %s51
      %p53 = scmp.eq.s32.totalorder %s27, 0
      %p54 = por %p52, %p53
      %s56 = sadd.s32 %s55, 1
      %p59 = scmp.eq.s32.totalorder %s21, 1
      %p60 = scmp.ne.s32.totalorder %s55, %s57
      %p61 = scmp.eq.s32.totalorder %s21, 0
      %p62 = por %p60, %p61
      %p63 = scmp.ne.s32.totalorder %s55, %s57
      %p64 = scmp.eq.s32.totalorder %s26, 1
      %p65 = por %p63, %p64
      %p66 = scmp.ne.s32.totalorder %s57, %s58
      %p67 = scmp.eq.s32.totalorder %s26, 0
      %p68 = por %p66, %p67
      %p69 = scmp.ne.s32.totalorder %s57, %s58
      %p70 = scmp.eq.s32.totalorder %s27, 1
      %p71 = por %p69, %p70
      %p73 = scmp.ne.s32.totalorder %s58, %s72
      %p74 = scmp.eq.s32.totalorder %s27, 0
      %p75 = por %p73, %p74
      %s77 = sadd.s32 %s76, 1
      %p80 = scmp.eq.s32.totalorder %s21, 1
      %p81 = scmp.ne.s32.totalorder %s76, %s78
      %p82 = scmp.eq.s32.totalorder %s21, 0
      %p83 = por %p81, %p82
      %p84 = scmp.ne.s32.totalorder %s76, %s78
      %p85 = scmp.eq.s32.totalorder %s26, 1
      %p86 = por %p84, %p85
      %p87 = scmp.ne.s32.totalorder %s78, %s79
      %p88 = scmp.eq.s32.totalorder %s26, 0
      %p89 = por %p87, %p88
      %p90 = scmp.ne.s32.totalorder %s78, %s79
      %p91 = scmp.eq.s32.totalorder %s27, 1
      %p92 = por %p90, %p91
      %p94 = scmp.ne.s32.totalorder %s79, %s93
      %p95 = scmp.eq.s32.totalorder %s27, 0
      %p96 = por %p94, %p95
      %s98 = sadd.s32 %s97, 1
      %p101 = scmp.eq.s32.totalorder %s21, 1
      %p102 = scmp.ne.s32.totalorder %s97, %s99
      %p103 = scmp.eq.s32.totalorder %s21, 0
      %p104 = por %p102, %p103
      %p105 = scmp.ne.s32.totalorder %s97, %s99
      %p106 = scmp.eq.s32.totalorder %s26, 1
      %p107 = por %p105, %p106
      %p108 = scmp.ne.s32.totalorder %s99, %s100
      %p109 = scmp.eq.s32.totalorder %s26, 0
      %p110 = por %p108, %p109
      %p111 = scmp.ne.s32.totalorder %s99, %s100
      %p112 = scmp.eq.s32.totalorder %s27, 1
      %p113 = por %p111, %p112
      %p115 = scmp.ne.s32.totalorder %s100, %s114
      %p116 = scmp.eq.s32.totalorder %s27, 0
      %p117 = por %p115, %p116
      %s119 = sadd.s32 %s118, 1
      %p122 = scmp.eq.s32.totalorder %s21, 1
      %p123 = scmp.ne.s32.totalorder %s118, %s120
      %p124 = scmp.eq.s32.totalorder %s21, 0
      %p125 = por %p123, %p124
      %p126 = scmp.ne.s32.totalorder %s118, %s120
      %p127 = scmp.eq.s32.totalorder %s26, 1
      %p128 = por %p126, %p127
      %p129 = scmp.ne.s32.totalorder %s120, %s121
      %p130 = scmp.eq.s32.totalorder %s26, 0
      %p131 = por %p129, %p130
      %p132 = scmp.ne.s32.totalorder %s120, %s121
      %p133 = scmp.eq.s32.totalorder %s27, 1
      %p134 = por %p132, %p133
      %p136 = scmp.ne.s32.totalorder %s121, %s135
      %p137 = scmp.eq.s32.totalorder %s27, 0
      %p138 = por %p136, %p137
      %s140 = sadd.s32 %s139, 1
      %p143 = scmp.eq.s32.totalorder %s21, 1
      %p144 = scmp.ne.s32.totalorder %s139, %s141
      %p145 = scmp.eq.s32.totalorder %s21, 0
      %p146 = por %p144, %p145
      %p147 = scmp.ne.s32.totalorder %s139, %s141
      %p148 = scmp.eq.s32.totalorder %s26, 1
      %p149 = por %p147, %p148
      %p150 = scmp.ne.s32.totalorder %s141, %s142
      %p151 = scmp.eq.s32.totalorder %s26, 0
      %p152 = por %p150, %p151
      %p153 = scmp.ne.s32.totalorder %s141, %s142
      %p154 = scmp.eq.s32.totalorder %s27, 1
      %p155 = por %p153, %p154
      %p157 = scmp.ne.s32.totalorder %s142, %s156
      %p158 = scmp.eq.s32.totalorder %s27, 0
      %p159 = por %p157, %p158
      %s161 = sadd.s32 %s160, 1
      %p164 = scmp.eq.s32.totalorder %s21, 1
      %p165 = scmp.ne.s32.totalorder %s160, %s162
      %p166 = scmp.eq.s32.totalorder %s21, 0
      %p167 = por %p165, %p166
      %p168 = scmp.ne.s32.totalorder %s160, %s162
      %p169 = scmp.eq.s32.totalorder %s26, 1
      %p170 = por %p168, %p169
      %p171 = scmp.ne.s32.totalorder %s162, %s163
      %p172 = scmp.eq.s32.totalorder %s26, 0
      %p173 = por %p171, %p172
      %p174 = scmp.ne.s32.totalorder %s162, %s163
      %p175 = scmp.eq.s32.totalorder %s27, 1
      %p176 = por %p174, %p175
      %p178 = scmp.ne.s32.totalorder %s163, %s177
      %p179 = scmp.eq.s32.totalorder %s27, 0
      %p180 = por %p178, %p179
      %s182 = sadd.s32 %s181, 1
      %p185 = scmp.eq.s32.totalorder %s21, 1
      %p186 = scmp.ne.s32.totalorder %s181, %s183
      %p187 = scmp.eq.s32.totalorder %s21, 0
      %p188 = por %p186, %p187
      %p189 = scmp.ne.s32.totalorder %s181, %s183
      %p190 = scmp.eq.s32.totalorder %s26, 1
      %p191 = por %p189, %p190
      %p192 = scmp.ne.s32.totalorder %s183, %s184
      %p193 = scmp.eq.s32.totalorder %s26, 0
      %p194 = por %p192, %p193
      %p195 = scmp.ne.s32.totalorder %s183, %s184
      %p196 = scmp.eq.s32.totalorder %s27, 1
      %p197 = por %p195, %p196
      %p199 = scmp.ne.s32.totalorder %s184, %s198
      %p200 = scmp.eq.s32.totalorder %s27, 0
      %p201 = por %p199, %p200
      %s203 = sadd.s32 %s202, 1
      %p206 = scmp.eq.s32.totalorder %s21, 1
      %p207 = scmp.ne.s32.totalorder %s202, %s204
      %p208 = scmp.eq.s32.totalorder %s21, 0
      %p209 = por %p207, %p208
      %p210 = scmp.ne.s32.totalorder %s202, %s204
      %p211 = scmp.eq.s32.totalorder %s26, 1
      %p212 = por %p210, %p211
      %p213 = scmp.ne.s32.totalorder %s204, %s205
      %p214 = scmp.eq.s32.totalorder %s26, 0
      %p215 = por %p213, %p214
      %p216 = scmp.ne.s32.totalorder %s204, %s205
      %p217 = scmp.eq.s32.totalorder %s27, 1
      %p218 = por %p216, %p217
      %p220 = scmp.ne.s32.totalorder %s205, %s219
      %p221 = scmp.eq.s32.totalorder %s27, 0
      %p222 = por %p220, %p221
      %s224 = sadd.s32 %s223, 1
      %p227 = scmp.eq.s32.totalorder %s21, 1
      %p228 = scmp.ne.s32.totalorder %s223, %s225
      %p229 = scmp.eq.s32.totalorder %s21, 0
      %p230 = por %p228, %p229
      %p231 = scmp.ne.s32.totalorder %s223, %s225
      %p232 = scmp.eq.s32.totalorder %s26, 1
      %p233 = por %p231, %p232
      %p234 = scmp.ne.s32.totalorder %s225, %s226
      %p235 = scmp.eq.s32.totalorder %s26, 0
      %p236 = por %p234, %p235
      %p237 = scmp.ne.s32.totalorder %s225, %s226
      %p238 = scmp.eq.s32.totalorder %s27, 1
      %p239 = por %p237, %p238
      %p241 = scmp.ne.s32.totalorder %s226, %s240
      %p242 = scmp.eq.s32.totalorder %s27, 0
      %p243 = por %p241, %p242
      %s245 = sadd.s32 %s244, 1
      %p248 = scmp.eq.s32.totalorder %s21, 1
      %p249 = scmp.ne.s32.totalorder %s244, %s246
      %p250 = scmp.eq.s32.totalorder %s21, 0
      %p251 = por %p249, %p250
      %p252 = scmp.ne.s32.totalorder %s244, %s246
      %p253 = scmp.eq.s32.totalorder %s26, 1
      %p254 = por %p252, %p253
      %p255 = scmp.ne.s32.totalorder %s246, %s247
      %p256 = scmp.eq.s32.totalorder %s26, 0
      %p257 = por %p255, %p256
      %p258 = scmp.ne.s32.totalorder %s246, %s247
      %p259 = scmp.eq.s32.totalorder %s27, 1
      %p260 = por %p258, %p259
      %p262 = scmp.ne.s32.totalorder %s247, %s261
      %p263 = scmp.eq.s32.totalorder %s27, 0
      %p264 = por %p262, %p263
      %s266 = sadd.s32 %s265, 1
      %p269 = scmp.eq.s32.totalorder %s21, 1
      %p270 = scmp.ne.s32.totalorder %s265, %s267
      %p271 = scmp.eq.s32.totalorder %s21, 0
      %p272 = por %p270, %p271
      %p273 = scmp.ne.s32.totalorder %s265, %s267
      %p274 = scmp.eq.s32.totalorder %s26, 1
      %p275 = por %p273, %p274
      %p276 = scmp.ne.s32.totalorder %s267, %s268
      %p277 = scmp.eq.s32.totalorder %s26, 0
      %p278 = por %p276, %p277
      %p279 = scmp.ne.s32.totalorder %s267, %s268
      %p280 = scmp.eq.s32.totalorder %s27, 1
      %p281 = por %p279, %p280
      %p283 = scmp.ne.s32.totalorder %s268, %s282
      %p284 = scmp.eq.s32.totalorder %s27, 0
      %p285 = por %p283, %p284
      %s286 = ssub.s32 %s21, %s28
      %p287 = scmp.eq.s32.totalorder %s286, 0
      %s289 = sadd.s32 %s288, 1
      %s290 = scalar_select %p287, %s288, %s289
      %p293 = pneg %p287
      %p294 = scmp.eq.s32.totalorder %s21, 1
      %p295 = por %p293, %p294
      %p296 = scmp.ne.s32.totalorder %s288, %s291
      %p297 = scmp.eq.s32.totalorder %s21, 0
      %p298 = por %p296, %p297
      %p299 = scmp.ne.s32.totalorder %s288, %s291
      %p300 = scmp.eq.s32.totalorder %s26, 1
      %p301 = por %p299, %p300
      %p302 = scmp.ne.s32.totalorder %s291, %s292
      %p303 = scmp.eq.s32.totalorder %s26, 0
      %p304 = por %p302, %p303
      %p305 = scmp.ne.s32.totalorder %s291, %s292
      %p306 = scmp.eq.s32.totalorder %s27, 1
      %p307 = por %p305, %p306
      %p309 = scmp.ne.s32.totalorder %s292, %s308
      %p310 = scmp.eq.s32.totalorder %s27, 0
      %p311 = por %p309, %p310
      %p312 = scmp.le.s32.totalorder 1, %s21
      %p313 = scmp.lt.s32.totalorder %s21, 3
      %p314 = pnand %p312, %p313
      %p315 = pneg %p314
      // Predicated region
      $region9: #{tpu_custom_call.1} parent=5 // pred_check
        _
      $region10: #{tpu_custom_call.1} parent=5 // pred_check_branch
        %317 = sbr.rel (%p314) target = $region12
      $region11: #{tpu_custom_call.1} parent=5 // pred_region
        %s318 = ssub.s32 %s21, 1
        // Predicated region
        $region13: #{tpu_custom_call.1} parent=11 // pred_check
          %p319 = pneg %p68
        $region14: #{tpu_custom_call.1} parent=11 // pred_check_branch
          %321 = sbr.rel (%p319) target = $region16
        $region15: #{tpu_custom_call.1} parent=11 // pred_region
          _
        $region16: #{tpu_custom_call.1} parent=11 // pred_fallthru
          _
        // Predicated region
        $region17: #{tpu_custom_call.1} parent=11 // pred_check
          %p322 = pneg %p89
        $region18: #{tpu_custom_call.1} parent=11 // pred_check_branch
          %324 = sbr.rel (%p322) target = $region20
        $region19: #{tpu_custom_call.1} parent=11 // pred_region
          _
        $region20: #{tpu_custom_call.1} parent=11 // pred_fallthru
          _
        // Predicated region
        $region21: #{tpu_custom_call.1} parent=11 // pred_check
          %p325 = pneg %p110
        $region22: #{tpu_custom_call.1} parent=11 // pred_check_branch
          %327 = sbr.rel (%p325) target = $region24
        $region23: #{tpu_custom_call.1} parent=11 // pred_region
          _
        $region24: #{tpu_custom_call.1} parent=11 // pred_fallthru
          _
        // Predicated region
        $region25: #{tpu_custom_call.1} parent=11 // pred_check
          %p328 = pneg %p131
        $region26: #{tpu_custom_call.1} parent=11 // pred_check_branch
          %330 = sbr.rel (%p328) target = $region28
        $region27: #{tpu_custom_call.1} parent=11 // pred_region
          _
        $region28: #{tpu_custom_call.1} parent=11 // pred_fallthru
          _
        // Predicated region
        $region29: #{tpu_custom_call.1} parent=11 // pred_check
          %p331 = pneg %p152
        $region30: #{tpu_custom_call.1} parent=11 // pred_check_branch
          %333 = sbr.rel (%p331) target = $region32
        $region31: #{tpu_custom_call.1} parent=11 // pred_region
          _
        $region32: #{tpu_custom_call.1} parent=11 // pred_fallthru
          _
        // Predicated region
        $region33: #{tpu_custom_call.1} parent=11 // pred_check
          %p334 = pneg %p173
        $region34: #{tpu_custom_call.1} parent=11 // pred_check_branch
          %336 = sbr.rel (%p334) target = $region36
        $region35: #{tpu_custom_call.1} parent=11 // pred_region
          _
        $region36: #{tpu_custom_call.1} parent=11 // pred_fallthru
          _
        // Predicated region
        $region37: #{tpu_custom_call.1} parent=11 // pred_check
          %p337 = pneg %p194
        $region38: #{tpu_custom_call.1} parent=11 // pred_check_branch
          %339 = sbr.rel (%p337) target = $region40
        $region39: #{tpu_custom_call.1} parent=11 // pred_region
          _
        $region40: #{tpu_custom_call.1} parent=11 // pred_fallthru
          _
        // Predicated region
        $region41: #{tpu_custom_call.1} parent=11 // pred_check
          %p340 = pneg %p215
        $region42: #{tpu_custom_call.1} parent=11 // pred_check_branch
          %342 = sbr.rel (%p340) target = $region44
        $region43: #{tpu_custom_call.1} parent=11 // pred_region
          _
        $region44: #{tpu_custom_call.1} parent=11 // pred_fallthru
          _
        // Predicated region
        $region45: #{tpu_custom_call.1} parent=11 // pred_check
          %p343 = pneg %p236
        $region46: #{tpu_custom_call.1} parent=11 // pred_check_branch
          %345 = sbr.rel (%p343) target = $region48
        $region47: #{tpu_custom_call.1} parent=11 // pred_region
          _
        $region48: #{tpu_custom_call.1} parent=11 // pred_fallthru
          _
        // Predicated region
        $region49: #{tpu_custom_call.1} parent=11 // pred_check
          %p346 = pneg %p257
        $region50: #{tpu_custom_call.1} parent=11 // pred_check_branch
          %348 = sbr.rel (%p346) target = $region52
        $region51: #{tpu_custom_call.1} parent=11 // pred_region
          _
        $region52: #{tpu_custom_call.1} parent=11 // pred_fallthru
          _
        // Predicated region
        $region53: #{tpu_custom_call.1} parent=11 // pred_check
          %p349 = pneg %p278
        $region54: #{tpu_custom_call.1} parent=11 // pred_check_branch
          %351 = sbr.rel (%p349) target = $region56
        $region55: #{tpu_custom_call.1} parent=11 // pred_region
          _
        $region56: #{tpu_custom_call.1} parent=11 // pred_fallthru
          _
      $region12: #{tpu_custom_call.1} parent=5 // pred_fallthru
        _
      %p352 = scmp.lt.s32.totalorder %s21, 2
      // Predicated region
      $region57: #{tpu_custom_call.1} parent=5 // pred_check
        %p353 = pneg %p352
      $region58: #{tpu_custom_call.1} parent=5 // pred_check_branch
        %355 = sbr.rel (%p353) target = $region60
      $region59: #{tpu_custom_call.1} parent=5 // pred_region
        // Predicated region
        $region61: #{tpu_custom_call.1} parent=59 // pred_check
          %p356 = pneg %p41
        $region62: #{tpu_custom_call.1} parent=59 // pred_check_branch
          %358 = sbr.rel (%p356) target = $region64
        $region63: #{tpu_custom_call.1} parent=59 // pred_region
          %p359 = scmp.lt.s32.totalorder %s21, 1
          %s360 = scalar_select %p359, %s21, 1
          %s361 = smul.addr %s360, 8
          %s362 = scalar_lea.vmem %s0, %s361
        $region64: #{tpu_custom_call.1} parent=59 // pred_fallthru
          _
      $region60: #{tpu_custom_call.1} parent=5 // pred_fallthru
        _
      %p363 = scmp.le.s32.totalorder 1, %s21
      %p364 = scmp.lt.s32.totalorder %s21, 3
      %p365 = pnand %p363, %p364
      %p366 = pneg %p365
      // Predicated region
      $region65: #{tpu_custom_call.1} parent=5 // pred_check
        _
      $region66: #{tpu_custom_call.1} parent=5 // pred_check_branch
        %368 = sbr.rel (%p365) target = $region68
      $region67: #{tpu_custom_call.1} parent=5 // pred_region
        %s369 = ssub.s32 %s21, 1
        %p370 = scmp.lt.s32.totalorder %s26, 1
        %s371 = scalar_select %p370, %s26, 1
        %s372 = smul.addr %s371, 8
        %s373 = scalar_lea.vmem %s0, %s372
        %p374 = pneg %p47
        %p375 = pneg %p44
        %p376 = pneg %p68
        %p377 = pneg %p65
        %p378 = pneg %p89
        %p379 = pneg %p86
        %p380 = pneg %p110
        %p381 = pneg %p107
        %p382 = pneg %p131
        %p383 = pneg %p128
        %p384 = pneg %p152
        %p385 = pneg %p149
        %p386 = pneg %p173
        %p387 = pneg %p170
        %p388 = pneg %p194
        %p389 = pneg %p191
        %p390 = pneg %p215
        %p391 = pneg %p212
        %p392 = pneg %p236
        %p393 = pneg %p233
        %p394 = pneg %p257
        %p395 = pneg %p254
        %p396 = pneg %p278
        %p397 = pneg %p275
        %p398 = pneg %p304
        %p399 = pneg %p301
        %s400 = sand.u32 %s291, 1
        %s401 = scalar_lea.sflag [#allocation4], %s400
        %s402 = sand.u32 %s291, 1
        %s403 = smul.addr %s402, 8
        %s404 = scalar_lea.vmem [#allocation3], %s403
        %p405 = scmp.lt.s32.totalorder %s26, 1
        %s406 = scalar_select %p405, %s26, 1
        %s407 = smul.addr %s406, 8
        %s408 = scalar_lea.vmem %s0, %s407
        %v409 = vld [vmem:[%s408] sm:$0xff]
        %v410 = vld [vmem:[%s1] sm:$0x1]
        %v411 = vld [vmem:[%s2] sm:$0x1]
        %vm412 = vcmask 261120
        %v413 = vsel %vm412, %v409, 0.0
        %414 = vadd.xlane.f32.xlu0 %v413
        %v415 = vpop.xlane.xlu0 %414
        %v416 = vrcp.pop 32.0
        %v417 = vmul.f32 %v415, %v416
        %v418 = vsub.f32 %v409, %v417
        %v419 = vmul.f32 %v418, %v418
        %v420 = vsel %vm412, %v419, 0.0
        %421 = vadd.xlane.f32.xlu0 %v420
        %v422 = vpop.xlane.xlu0 %421
        %v423 = vmul.f32 %v422, %v416
        %v424 = vadd.f32 %v423, 1e-05
        %v425 = vrsqrt.pop %v424
        %v426 = vmul.f32 %v418, %v425
        %v428 = vlaneseq
        %v429 = vshrl.u32 %v428, 7
        %v430 = vsub.s32 0, %v429
        %v431 = vrot.slane %v410, %v430
        %v433 = vmul.f32 %v426, %v431
        %v435 = vlaneseq
        %v436 = vshrl.u32 %v435, 7
        %v437 = vsub.s32 0, %v436
        %v438 = vrot.slane %v411, %v437
        %v440 = vadd.f32 %v433, %v438
        %v441 = vld [vmem:[%s3] sm:$0xff]
        %v442 = vld [vmem:[%s3 + $0x8] sm:$0xff]
        %v443 = vld [vmem:[%s3 + $0x10] sm:$0xff]
        %v444 = vld [vmem:[%s3 + $0x18] sm:$0xff]
        %v446 = vsel %vm412, %v440, 0
        %448 = vmatprep.subr.mxu0 0.0
        %449 = vmatpush1.msra.mxu0 0.0
        %450 = vmatprep.subr.mxu0 0.0
        %451 = vmatpush1.msra.mxu0 0.0
        %452 = vmatprep.subr.mxu0 0.0
        %453 = vmatpush1.msra.mxu0 0.0
        %454 = vmatprep.subr.mxu0 0.0
        %455 = vmatpush1.msra.mxu0 0.0
        %456 = vmatprep.subr.mxu0 0.0
        %457 = vmatpush1.msra.mxu0 0.0
        %458 = vmatprep.subr.mxu0 0.0
        %459 = vmatpush1.msra.mxu0 0.0
        %460 = vmatprep.subr.mxu0 0.0
        %461 = vmatpush1.msra.mxu0 0.0
        %462 = vmatprep.subr.mxu0 0.0
        %463 = vmatpush1.msra.mxu0 0.0
        %464 = vmatprep.subr.mxu0 0.0
        %465 = vmatpush1.msra.mxu0 0.0
        %466 = vmatprep.subr.mxu0 0.0
        %467 = vmatpush1.msra.mxu0 0.0
        %468 = vmatprep.subr.mxu0 0.0
        %469 = vmatpush1.msra.mxu0 0.0
        %470 = vmatprep.subr.mxu0 0.0
        %471 = vmatpush1.msra.mxu0 0.0
        %472 = vmatprep.subr.mxu0 0.0
        %473 = vmatpush1.msra.mxu0 %v444
        %474 = vmatprep.subr.mxu0 0.0
        %475 = vmatpush1.msra.mxu0 %v443
        %476 = vmatprep.subr.mxu0 0.0
        %477 = vmatpush1.msra.mxu0 %v442
        %478 = vmatprep.subr.mxu0 0.0
        %479 = vmatpush1.msra.mxu0 %v441
        %480 = vmatprep.subr.mxu0 0.0
        %481 = vmatpush2.msra.mxu0 0.0
        %482 = vmatprep.subr.mxu0 0.0
        %483 = vmatpush2.msra.mxu0 0.0
        %484 = vmatprep.subr.mxu0 0.0
        %485 = vmatpush2.msra.mxu0 0.0
        %486 = vmatprep.subr.mxu0 0.0
        %487 = vmatpush2.msra.mxu0 0.0
        %488 = vmatprep.subr.mxu0 0.0
        %489 = vmatpush2.msra.mxu0 0.0
        %490 = vmatprep.subr.mxu0 0.0
        %491 = vmatpush2.msra.mxu0 0.0
        %492 = vmatprep.subr.mxu0 0.0
        %493 = vmatpush2.msra.mxu0 0.0
        %494 = vmatprep.subr.mxu0 0.0
        %495 = vmatpush2.msra.mxu0 0.0
        %496 = vmatprep.subr.mxu0 0.0
        %497 = vmatpush2.msra.mxu0 0.0
        %498 = vmatprep.subr.mxu0 0.0
        %499 = vmatpush2.msra.mxu0 0.0
        %500 = vmatprep.subr.mxu0 0.0
        %501 = vmatpush2.msra.mxu0 0.0
        %502 = vmatprep.subr.mxu0 0.0
        %503 = vmatpush2.msra.mxu0 0.0
        %504 = vmatprep.subr.mxu0 0.0
        %505 = vmatpush2.msra.mxu0 0.0
        %506 = vmatprep.subr.mxu0 0.0
        %507 = vmatpush2.msra.mxu0 0.0
        %508 = vmatprep.subr.mxu0 0.0
        %509 = vmatpush2.msra.mxu0 0.0
        %510 = vmatprep.subr.mxu0 0.0
        %511 = vmatpush2.msra.mxu0 0.0
        %512 = vmatprep.mubr.f32.mxu0 0.0
        %513 = vmatmul.mubr.f32.gmra.mxu0 %v446
        %v514 = vpop.f32.mrf.mxu0
        %v515 = vadd.f32 0.0, %v514
        %v516 = vpop.f32.mrf.mxu0
        %517 = vdwg.mxu0
        %519 = vrot.lane.b32.xlu0 %v515, 96
        %v520 = vpop.permute.xlu0 %519
        %vm521 = vcmask 64512
        %v522 = vsel %vm521, %v515, 0
        %v524 = vsel %vm521, %v520, 0
        %526 = vmatprep.subr.mxu0 0.0
        %527 = vmatpush1.xpose.msra.mxu0 0.0
        %528 = vmatprep.subr.mxu0 0.0
        %529 = vmatpush1.xpose.msra.mxu0 0.0
        %530 = vmatprep.subr.mxu0 0.0
        %531 = vmatpush1.xpose.msra.mxu0 0.0
        %532 = vmatprep.subr.mxu0 0.0
        %533 = vmatpush1.xpose.msra.mxu0 0.0
        %534 = vmatprep.subr.mxu0 0.0
        %535 = vmatpush1.xpose.msra.mxu0 0.0
        %536 = vmatprep.subr.mxu0 0.0
        %537 = vmatpush1.xpose.msra.mxu0 0.0
        %538 = vmatprep.subr.mxu0 0.0
        %539 = vmatpush1.xpose.msra.mxu0 0.0
        %540 = vmatprep.subr.mxu0 0.0
        %541 = vmatpush1.xpose.msra.mxu0 0.0
        %542 = vmatprep.subr.mxu0 0.0
        %543 = vmatpush1.xpose.msra.mxu0 0.0
        %544 = vmatprep.subr.mxu0 0.0
        %545 = vmatpush1.xpose.msra.mxu0 0.0
        %546 = vmatprep.subr.mxu0 0.0
        %547 = vmatpush1.xpose.msra.mxu0 0.0
        %548 = vmatprep.subr.mxu0 0.0
        %549 = vmatpush1.xpose.msra.mxu0 0.0
        %550 = vmatprep.subr.mxu0 0.0
        %551 = vmatpush1.xpose.msra.mxu0 0.0
        %552 = vmatprep.subr.mxu0 0.0
        %553 = vmatpush1.xpose.msra.mxu0 0.0
        %554 = vmatprep.subr.mxu0 0.0
        %555 = vmatpush1.xpose.msra.mxu0 0.0
        %556 = vmatprep.subr.mxu0 0.0
        %557 = vmatpush1.xpose.msra.mxu0 %v524
        %558 = vmatprep.subr.mxu0 0.0
        %559 = vmatpush2.xpose.msra.mxu0 0.0
        %560 = vmatprep.subr.mxu0 0.0
        %561 = vmatpush2.xpose.msra.mxu0 0.0
        %562 = vmatprep.subr.mxu0 0.0
        %563 = vmatpush2.xpose.msra.mxu0 0.0
        %564 = vmatprep.subr.mxu0 0.0
        %565 = vmatpush2.xpose.msra.mxu0 0.0
        %566 = vmatprep.subr.mxu0 0.0
        %567 = vmatpush2.xpose.msra.mxu0 0.0
        %568 = vmatprep.subr.mxu0 0.0
        %569 = vmatpush2.xpose.msra.mxu0 0.0
        %570 = vmatprep.subr.mxu0 0.0
        %571 = vmatpush2.xpose.msra.mxu0 0.0
        %572 = vmatprep.subr.mxu0 0.0
        %573 = vmatpush2.xpose.msra.mxu0 0.0
        %574 = vmatprep.subr.mxu0 0.0
        %575 = vmatpush2.xpose.msra.mxu0 0.0
        %576 = vmatprep.subr.mxu0 0.0
        %577 = vmatpush2.xpose.msra.mxu0 0.0
        %578 = vmatprep.subr.mxu0 0.0
        %579 = vmatpush2.xpose.msra.mxu0 0.0
        %580 = vmatprep.subr.mxu0 0.0
        %581 = vmatpush2.xpose.msra.mxu0 0.0
        %582 = vmatprep.subr.mxu0 0.0
        %583 = vmatpush2.xpose.msra.mxu0 0.0
        %584 = vmatprep.subr.mxu0 0.0
        %585 = vmatpush2.xpose.msra.mxu0 0.0
        %586 = vmatprep.subr.mxu0 0.0
        %587 = vmatpush2.xpose.msra.mxu0 0.0
        %588 = vmatprep.subr.mxu0 0.0
        %589 = vmatpush2.xpose.msra.mxu0 0.0
        %590 = vmatprep.mubr.f32.mxu0 0.0
        %591 = vmatmul.mubr.f32.gmra.mxu0 %v522
        %v592 = vpop.f32.mrf.mxu0
        %v593 = vadd.f32 0.0, %v592
        %v594 = vpop.f32.mrf.mxu0
        %595 = vdwg.mxu0
        %v596 = vmul.f32 %v593, 0.35355338
        %v597 = vsel %vm521, %v596, -inf
        %598 = vmax.xlane.f32.xlu0 %v597
        %v599 = vpop.xlane.xlu0 %598
        %v600 = vsub.f32 %v596, %v599
        %v601 = vmul.f32 %v600, 1.442695
        %v602 = vpow.pop %v601
        %v603 = vsel %vm521, %v602, 0.0
        %604 = vadd.xlane.f32.xlu0 %v603
        %v605 = vpop.xlane.xlu0 %604
        %v606 = vrcp.pop %v605
        %v607 = vmul.f32 %v602, %v606
        %608 = vrot.lane.b32.xlu0 %v515, 64
        %v609 = vpop.permute.xlu0 %608
        %v612 = vsel %vm521, %v607, 0
        %614 = vmatprep.subr.mxu0 0.0
        %615 = vmatpush1.msra.mxu0 0.0
        %616 = vmatprep.subr.mxu0 0.0
        %617 = vmatpush1.msra.mxu0 0.0
        %618 = vmatprep.subr.mxu0 0.0
        %619 = vmatpush1.msra.mxu0 0.0
        %620 = vmatprep.subr.mxu0 0.0
        %621 = vmatpush1.msra.mxu0 0.0
        %622 = vmatprep.subr.mxu0 0.0
        %623 = vmatpush1.msra.mxu0 0.0
        %624 = vmatprep.subr.mxu0 0.0
        %625 = vmatpush1.msra.mxu0 0.0
        %626 = vmatprep.subr.mxu0 0.0
        %627 = vmatpush1.msra.mxu0 0.0
        %628 = vmatprep.subr.mxu0 0.0
        %629 = vmatpush1.msra.mxu0 0.0
        %630 = vmatprep.subr.mxu0 0.0
        %631 = vmatpush1.msra.mxu0 0.0
        %632 = vmatprep.subr.mxu0 0.0
        %633 = vmatpush1.msra.mxu0 0.0
        %634 = vmatprep.subr.mxu0 0.0
        %635 = vmatpush1.msra.mxu0 0.0
        %636 = vmatprep.subr.mxu0 0.0
        %637 = vmatpush1.msra.mxu0 0.0
        %638 = vmatprep.subr.mxu0 0.0
        %639 = vmatpush1.msra.mxu0 0.0
        %640 = vmatprep.subr.mxu0 0.0
        %641 = vmatpush1.msra.mxu0 0.0
        %642 = vmatprep.subr.mxu0 0.0
        %643 = vmatpush1.msra.mxu0 0.0
        %644 = vmatprep.subr.mxu0 0.0
        %645 = vmatpush1.msra.mxu0 %v609
        %646 = vmatprep.subr.mxu0 0.0
        %647 = vmatpush2.msra.mxu0 0.0
        %648 = vmatprep.subr.mxu0 0.0
        %649 = vmatpush2.msra.mxu0 0.0
        %650 = vmatprep.subr.mxu0 0.0
        %651 = vmatpush2.msra.mxu0 0.0
        %652 = vmatprep.subr.mxu0 0.0
        %653 = vmatpush2.msra.mxu0 0.0
        %654 = vmatprep.subr.mxu0 0.0
        %655 = vmatpush2.msra.mxu0 0.0
        %656 = vmatprep.subr.mxu0 0.0
        %657 = vmatpush2.msra.mxu0 0.0
        %658 = vmatprep.subr.mxu0 0.0
        %659 = vmatpush2.msra.mxu0 0.0
        %660 = vmatprep.subr.mxu0 0.0
        %661 = vmatpush2.msra.mxu0 0.0
        %662 = vmatprep.subr.mxu0 0.0
        %663 = vmatpush2.msra.mxu0 0.0
        %664 = vmatprep.subr.mxu0 0.0
        %665 = vmatpush2.msra.mxu0 0.0
        %666 = vmatprep.subr.mxu0 0.0
        %667 = vmatpush2.msra.mxu0 0.0
        %668 = vmatprep.subr.mxu0 0.0
        %669 = vmatpush2.msra.mxu0 0.0
        %670 = vmatprep.subr.mxu0 0.0
        %671 = vmatpush2.msra.mxu0 0.0
        %672 = vmatprep.subr.mxu0 0.0
        %673 = vmatpush2.msra.mxu0 0.0
        %674 = vmatprep.subr.mxu0 0.0
        %675 = vmatpush2.msra.mxu0 0.0
        %676 = vmatprep.subr.mxu0 0.0
        %677 = vmatpush2.msra.mxu0 0.0
        %678 = vmatprep.mubr.f32.mxu0 0.0
        %679 = vmatmul.mubr.f32.gmra.mxu0 %v612
        %v680 = vpop.f32.mrf.mxu0
        %v681 = vadd.f32 0.0, %v680
        %v682 = vpop.f32.mrf.mxu0
        %683 = vdwg.mxu0
        %684 = vst.msk [vmem:[#allocation2] sm:$0xff] %vm521, %v681
        %685 = vrot.lane.b32.xlu0 %v515, 120
        %v686 = vpop.permute.xlu0 %685
        %687 = vrot.lane.b32.xlu0 %v515, 88
        %v688 = vpop.permute.xlu0 %687
        %v689 = vsel %vm521, %v686, 0
        %v691 = vsel %vm521, %v688, 0
        %693 = vmatprep.subr.mxu0 0.0
        %694 = vmatpush1.xpose.msra.mxu0 0.0
        %695 = vmatprep.subr.mxu0 0.0
        %696 = vmatpush1.xpose.msra.mxu0 0.0
        %697 = vmatprep.subr.mxu0 0.0
        %698 = vmatpush1.xpose.msra.mxu0 0.0
        %699 = vmatprep.subr.mxu0 0.0
        %700 = vmatpush1.xpose.msra.mxu0 0.0
        %701 = vmatprep.subr.mxu0 0.0
        %702 = vmatpush1.xpose.msra.mxu0 0.0
        %703 = vmatprep.subr.mxu0 0.0
        %704 = vmatpush1.xpose.msra.mxu0 0.0
        %705 = vmatprep.subr.mxu0 0.0
        %706 = vmatpush1.xpose.msra.mxu0 0.0
        %707 = vmatprep.subr.mxu0 0.0
        %708 = vmatpush1.xpose.msra.mxu0 0.0
        %709 = vmatprep.subr.mxu0 0.0
        %710 = vmatpush1.xpose.msra.mxu0 0.0
        %711 = vmatprep.subr.mxu0 0.0
        %712 = vmatpush1.xpose.msra.mxu0 0.0
        %713 = vmatprep.subr.mxu0 0.0
        %714 = vmatpush1.xpose.msra.mxu0 0.0
        %715 = vmatprep.subr.mxu0 0.0
        %716 = vmatpush1.xpose.msra.mxu0 0.0
        %717 = vmatprep.subr.mxu0 0.0
        %718 = vmatpush1.xpose.msra.mxu0 0.0
        %719 = vmatprep.subr.mxu0 0.0
        %720 = vmatpush1.xpose.msra.mxu0 0.0
        %721 = vmatprep.subr.mxu0 0.0
        %722 = vmatpush1.xpose.msra.mxu0 0.0
        %723 = vmatprep.subr.mxu0 0.0
        %724 = vmatpush1.xpose.msra.mxu0 %v691
        %725 = vmatprep.subr.mxu0 0.0
        %726 = vmatpush2.xpose.msra.mxu0 0.0
        %727 = vmatprep.subr.mxu0 0.0
        %728 = vmatpush2.xpose.msra.mxu0 0.0
        %729 = vmatprep.subr.mxu0 0.0
        %730 = vmatpush2.xpose.msra.mxu0 0.0
        %731 = vmatprep.subr.mxu0 0.0
        %732 = vmatpush2.xpose.msra.mxu0 0.0
        %733 = vmatprep.subr.mxu0 0.0
        %734 = vmatpush2.xpose.msra.mxu0 0.0
        %735 = vmatprep.subr.mxu0 0.0
        %736 = vmatpush2.xpose.msra.mxu0 0.0
        %737 = vmatprep.subr.mxu0 0.0
        %738 = vmatpush2.xpose.msra.mxu0 0.0
        %739 = vmatprep.subr.mxu0 0.0
        %740 = vmatpush2.xpose.msra.mxu0 0.0
        %741 = vmatprep.subr.mxu0 0.0
        %742 = vmatpush2.xpose.msra.mxu0 0.0
        %743 = vmatprep.subr.mxu0 0.0
        %744 = vmatpush2.xpose.msra.mxu0 0.0
        %745 = vmatprep.subr.mxu0 0.0
        %746 = vmatpush2.xpose.msra.mxu0 0.0
        %747 = vmatprep.subr.mxu0 0.0
        %748 = vmatpush2.xpose.msra.mxu0 0.0
        %749 = vmatprep.subr.mxu0 0.0
        %750 = vmatpush2.xpose.msra.mxu0 0.0
        %751 = vmatprep.subr.mxu0 0.0
        %752 = vmatpush2.xpose.msra.mxu0 0.0
        %753 = vmatprep.subr.mxu0 0.0
        %754 = vmatpush2.xpose.msra.mxu0 0.0
        %755 = vmatprep.subr.mxu0 0.0
        %756 = vmatpush2.xpose.msra.mxu0 0.0
        %757 = vmatprep.mubr.f32.mxu0 0.0
        %758 = vmatmul.mubr.f32.gmra.mxu0 %v689
        %v759 = vpop.f32.mrf.mxu0
        %v760 = vadd.f32 0.0, %v759
        %v761 = vpop.f32.mrf.mxu0
        %762 = vdwg.mxu0
        %v763 = vmul.f32 %v760, 0.35355338
        %v764 = vsel %vm521, %v763, -inf
        %765 = vmax.xlane.f32.xlu0 %v764
        %v766 = vpop.xlane.xlu0 %765
        %v767 = vsub.f32 %v763, %v766
        %v768 = vmul.f32 %v767, 1.442695
        %v769 = vpow.pop %v768
        %v770 = vsel %vm521, %v769, 0.0
        %771 = vadd.xlane.f32.xlu0 %v770
        %v772 = vpop.xlane.xlu0 %771
        %v773 = vrcp.pop %v772
        %v774 = vmul.f32 %v769, %v773
        %775 = vrot.lane.b32.xlu0 %v515, 56
        %v776 = vpop.permute.xlu0 %775
        %v779 = vsel %vm521, %v774, 0
        %781 = vmatprep.subr.mxu0 0.0
        %782 = vmatpush1.msra.mxu0 0.0
        %783 = vmatprep.subr.mxu0 0.0
        %784 = vmatpush1.msra.mxu0 0.0
        %785 = vmatprep.subr.mxu0 0.0
        %786 = vmatpush1.msra.mxu0 0.0
        %787 = vmatprep.subr.mxu0 0.0
        %788 = vmatpush1.msra.mxu0 0.0
        %789 = vmatprep.subr.mxu0 0.0
        %790 = vmatpush1.msra.mxu0 0.0
        %791 = vmatprep.subr.mxu0 0.0
        %792 = vmatpush1.msra.mxu0 0.0
        %793 = vmatprep.subr.mxu0 0.0
        %794 = vmatpush1.msra.mxu0 0.0
        %795 = vmatprep.subr.mxu0 0.0
        %796 = vmatpush1.msra.mxu0 0.0
        %797 = vmatprep.subr.mxu0 0.0
        %798 = vmatpush1.msra.mxu0 0.0
        %799 = vmatprep.subr.mxu0 0.0
        %800 = vmatpush1.msra.mxu0 0.0
        %801 = vmatprep.subr.mxu0 0.0
        %802 = vmatpush1.msra.mxu0 0.0
        %803 = vmatprep.subr.mxu0 0.0
        %804 = vmatpush1.msra.mxu0 0.0
        %805 = vmatprep.subr.mxu0 0.0
        %806 = vmatpush1.msra.mxu0 0.0
        %807 = vmatprep.subr.mxu0 0.0
        %808 = vmatpush1.msra.mxu0 0.0
        %809 = vmatprep.subr.mxu0 0.0
        %810 = vmatpush1.msra.mxu0 0.0
        %811 = vmatprep.subr.mxu0 0.0
        %812 = vmatpush1.msra.mxu0 %v776
        %813 = vmatprep.subr.mxu0 0.0
        %814 = vmatpush2.msra.mxu0 0.0
        %815 = vmatprep.subr.mxu0 0.0
        %816 = vmatpush2.msra.mxu0 0.0
        %817 = vmatprep.subr.mxu0 0.0
        %818 = vmatpush2.msra.mxu0 0.0
        %819 = vmatprep.subr.mxu0 0.0
        %820 = vmatpush2.msra.mxu0 0.0
        %821 = vmatprep.subr.mxu0 0.0
        %822 = vmatpush2.msra.mxu0 0.0
        %823 = vmatprep.subr.mxu0 0.0
        %824 = vmatpush2.msra.mxu0 0.0
        %825 = vmatprep.subr.mxu0 0.0
        %826 = vmatpush2.msra.mxu0 0.0
        %827 = vmatprep.subr.mxu0 0.0
        %828 = vmatpush2.msra.mxu0 0.0
        %829 = vmatprep.subr.mxu0 0.0
        %830 = vmatpush2.msra.mxu0 0.0
        %831 = vmatprep.subr.mxu0 0.0
        %832 = vmatpush2.msra.mxu0 0.0
        %833 = vmatprep.subr.mxu0 0.0
        %834 = vmatpush2.msra.mxu0 0.0
        %835 = vmatprep.subr.mxu0 0.0
        %836 = vmatpush2.msra.mxu0 0.0
        %837 = vmatprep.subr.mxu0 0.0
        %838 = vmatpush2.msra.mxu0 0.0
        %839 = vmatprep.subr.mxu0 0.0
        %840 = vmatpush2.msra.mxu0 0.0
        %841 = vmatprep.subr.mxu0 0.0
        %842 = vmatpush2.msra.mxu0 0.0
        %843 = vmatprep.subr.mxu0 0.0
        %844 = vmatpush2.msra.mxu0 0.0
        %845 = vmatprep.mubr.f32.mxu0 0.0
        %846 = vmatmul.mubr.f32.gmra.mxu0 %v779
        %v847 = vpop.f32.mrf.mxu0
        %v848 = vadd.f32 0.0, %v847
        %v849 = vpop.f32.mrf.mxu0
        %850 = vdwg.mxu0
        %852 = vrot.lane.b32.xlu0 %v848, 8
        %v853 = vpop.permute.xlu0 %852
        %vm855 = vcmask 130112
        %856 = vst.msk [vmem:[#allocation2] sm:$0xff] %vm855, %v853
        %857 = vrot.lane.b32.xlu0 %v515, 112
        %v858 = vpop.permute.xlu0 %857
        %859 = vrot.lane.b32.xlu0 %v515, 80
        %v860 = vpop.permute.xlu0 %859
        %v861 = vsel %vm521, %v858, 0
        %v863 = vsel %vm521, %v860, 0
        %865 = vmatprep.subr.mxu0 0.0
        %866 = vmatpush1.xpose.msra.mxu0 0.0
        %867 = vmatprep.subr.mxu0 0.0
        %868 = vmatpush1.xpose.msra.mxu0 0.0
        %869 = vmatprep.subr.mxu0 0.0
        %870 = vmatpush1.xpose.msra.mxu0 0.0
        %871 = vmatprep.subr.mxu0 0.0
        %872 = vmatpush1.xpose.msra.mxu0 0.0
        %873 = vmatprep.subr.mxu0 0.0
        %874 = vmatpush1.xpose.msra.mxu0 0.0
        %875 = vmatprep.subr.mxu0 0.0
        %876 = vmatpush1.xpose.msra.mxu0 0.0
        %877 = vmatprep.subr.mxu0 0.0
        %878 = vmatpush1.xpose.msra.mxu0 0.0
        %879 = vmatprep.subr.mxu0 0.0
        %880 = vmatpush1.xpose.msra.mxu0 0.0
        %881 = vmatprep.subr.mxu0 0.0
        %882 = vmatpush1.xpose.msra.mxu0 0.0
        %883 = vmatprep.subr.mxu0 0.0
        %884 = vmatpush1.xpose.msra.mxu0 0.0
        %885 = vmatprep.subr.mxu0 0.0
        %886 = vmatpush1.xpose.msra.mxu0 0.0
        %887 = vmatprep.subr.mxu0 0.0
        %888 = vmatpush1.xpose.msra.mxu0 0.0
        %889 = vmatprep.subr.mxu0 0.0
        %890 = vmatpush1.xpose.msra.mxu0 0.0
        %891 = vmatprep.subr.mxu0 0.0
        %892 = vmatpush1.xpose.msra.mxu0 0.0
        %893 = vmatprep.subr.mxu0 0.0
        %894 = vmatpush1.xpose.msra.mxu0 0.0
        %895 = vmatprep.subr.mxu0 0.0
        %896 = vmatpush1.xpose.msra.mxu0 %v863
        %897 = vmatprep.subr.mxu0 0.0
        %898 = vmatpush2.xpose.msra.mxu0 0.0
        %899 = vmatprep.subr.mxu0 0.0
        %900 = vmatpush2.xpose.msra.mxu0 0.0
        %901 = vmatprep.subr.mxu0 0.0
        %902 = vmatpush2.xpose.msra.mxu0 0.0
        %903 = vmatprep.subr.mxu0 0.0
        %904 = vmatpush2.xpose.msra.mxu0 0.0
        %905 = vmatprep.subr.mxu0 0.0
        %906 = vmatpush2.xpose.msra.mxu0 0.0
        %907 = vmatprep.subr.mxu0 0.0
        %908 = vmatpush2.xpose.msra.mxu0 0.0
        %909 = vmatprep.subr.mxu0 0.0
        %910 = vmatpush2.xpose.msra.mxu0 0.0
        %911 = vmatprep.subr.mxu0 0.0
        %912 = vmatpush2.xpose.msra.mxu0 0.0
        %913 = vmatprep.subr.mxu0 0.0
        %914 = vmatpush2.xpose.msra.mxu0 0.0
        %915 = vmatprep.subr.mxu0 0.0
        %916 = vmatpush2.xpose.msra.mxu0 0.0
        %917 = vmatprep.subr.mxu0 0.0
        %918 = vmatpush2.xpose.msra.mxu0 0.0
        %919 = vmatprep.subr.mxu0 0.0
        %920 = vmatpush2.xpose.msra.mxu0 0.0
        %921 = vmatprep.subr.mxu0 0.0
        %922 = vmatpush2.xpose.msra.mxu0 0.0
        %923 = vmatprep.subr.mxu0 0.0
        %924 = vmatpush2.xpose.msra.mxu0 0.0
        %925 = vmatprep.subr.mxu0 0.0
        %926 = vmatpush2.xpose.msra.mxu0 0.0
        %927 = vmatprep.subr.mxu0 0.0
        %928 = vmatpush2.xpose.msra.mxu0 0.0
        %929 = vmatprep.mubr.f32.mxu0 0.0
        %930 = vmatmul.mubr.f32.gmra.mxu0 %v861
        %v931 = vpop.f32.mrf.mxu0
        %v932 = vadd.f32 0.0, %v931
        %v933 = vpop.f32.mrf.mxu0
        %934 = vdwg.mxu0
        %v935 = vmul.f32 %v932, 0.35355338
        %v936 = vsel %vm521, %v935, -inf
        %937 = vmax.xlane.f32.xlu0 %v936
        %v938 = vpop.xlane.xlu0 %937
        %v939 = vsub.f32 %v935, %v938
        %v940 = vmul.f32 %v939, 1.442695
        %v941 = vpow.pop %v940
        %v942 = vsel %vm521, %v941, 0.0
        %943 = vadd.xlane.f32.xlu0 %v942
        %v944 = vpop.xlane.xlu0 %943
        %v945 = vrcp.pop %v944
        %v946 = vmul.f32 %v941, %v945
        %947 = vrot.lane.b32.xlu0 %v515, 48
        %v948 = vpop.permute.xlu0 %947
        %v951 = vsel %vm521, %v946, 0
        %953 = vmatprep.subr.mxu0 0.0
        %954 = vmatpush1.msra.mxu0 0.0
        %955 = vmatprep.subr.mxu0 0.0
        %956 = vmatpush1.msra.mxu0 0.0
        %957 = vmatprep.subr.mxu0 0.0
        %958 = vmatpush1.msra.mxu0 0.0
        %959 = vmatprep.subr.mxu0 0.0
        %960 = vmatpush1.msra.mxu0 0.0
        %961 = vmatprep.subr.mxu0 0.0
        %962 = vmatpush1.msra.mxu0 0.0
        %963 = vmatprep.subr.mxu0 0.0
        %964 = vmatpush1.msra.mxu0 0.0
        %965 = vmatprep.subr.mxu0 0.0
        %966 = vmatpush1.msra.mxu0 0.0
        %967 = vmatprep.subr.mxu0 0.0
        %968 = vmatpush1.msra.mxu0 0.0
        %969 = vmatprep.subr.mxu0 0.0
        %970 = vmatpush1.msra.mxu0 0.0
        %971 = vmatprep.subr.mxu0 0.0
        %972 = vmatpush1.msra.mxu0 0.0
        %973 = vmatprep.subr.mxu0 0.0
        %974 = vmatpush1.msra.mxu0 0.0
        %975 = vmatprep.subr.mxu0 0.0
        %976 = vmatpush1.msra.mxu0 0.0
        %977 = vmatprep.subr.mxu0 0.0
        %978 = vmatpush1.msra.mxu0 0.0
        %979 = vmatprep.subr.mxu0 0.0
        %980 = vmatpush1.msra.mxu0 0.0
        %981 = vmatprep.subr.mxu0 0.0
        %982 = vmatpush1.msra.mxu0 0.0
        %983 = vmatprep.subr.mxu0 0.0
        %984 = vmatpush1.msra.mxu0 %v948
        %985 = vmatprep.subr.mxu0 0.0
        %986 = vmatpush2.msra.mxu0 0.0
        %987 = vmatprep.subr.mxu0 0.0
        %988 = vmatpush2.msra.mxu0 0.0
        %989 = vmatprep.subr.mxu0 0.0
        %990 = vmatpush2.msra.mxu0 0.0
        %991 = vmatprep.subr.mxu0 0.0
        %992 = vmatpush2.msra.mxu0 0.0
        %993 = vmatprep.subr.mxu0 0.0
        %994 = vmatpush2.msra.mxu0 0.0
        %995 = vmatprep.subr.mxu0 0.0
        %996 = vmatpush2.msra.mxu0 0.0
        %997 = vmatprep.subr.mxu0 0.0
        %998 = vmatpush2.msra.mxu0 0.0
        %999 = vmatprep.subr.mxu0 0.0
        %1000 = vmatpush2.msra.mxu0 0.0
        %1001 = vmatprep.subr.mxu0 0.0
        %1002 = vmatpush2.msra.mxu0 0.0
        %1003 = vmatprep.subr.mxu0 0.0
        %1004 = vmatpush2.msra.mxu0 0.0
        %1005 = vmatprep.subr.mxu0 0.0
        %1006 = vmatpush2.msra.mxu0 0.0
        %1007 = vmatprep.subr.mxu0 0.0
        %1008 = vmatpush2.msra.mxu0 0.0
        %1009 = vmatprep.subr.mxu0 0.0
        %1010 = vmatpush2.msra.mxu0 0.0
        %1011 = vmatprep.subr.mxu0 0.0
        %1012 = vmatpush2.msra.mxu0 0.0
        %1013 = vmatprep.subr.mxu0 0.0
        %1014 = vmatpush2.msra.mxu0 0.0
        %1015 = vmatprep.subr.mxu0 0.0
        %1016 = vmatpush2.msra.mxu0 0.0
        %1017 = vmatprep.mubr.f32.mxu0 0.0
        %1018 = vmatmul.mubr.f32.gmra.mxu0 %v951
        %v1019 = vpop.f32.mrf.mxu0
        %v1020 = vadd.f32 0.0, %v1019
        %v1021 = vpop.f32.mrf.mxu0
        %1022 = vdwg.mxu0
        %1024 = vrot.lane.b32.xlu0 %v1020, 16
        %v1025 = vpop.permute.xlu0 %1024
        %vm1027 = vcmask 195712
        %1028 = vst.msk [vmem:[#allocation2] sm:$0xff] %vm1027, %v1025
        %1029 = vrot.lane.b32.xlu0 %v515, 104
        %v1030 = vpop.permute.xlu0 %1029
        %1031 = vrot.lane.b32.xlu0 %v515, 72
        %v1032 = vpop.permute.xlu0 %1031
        %v1033 = vsel %vm521, %v1030, 0
        %v1035 = vsel %vm521, %v1032, 0
        %1037 = vmatprep.subr.mxu0 0.0
        %1038 = vmatpush1.xpose.msra.mxu0 0.0
        %1039 = vmatprep.subr.mxu0 0.0
        %1040 = vmatpush1.xpose.msra.mxu0 0.0
        %1041 = vmatprep.subr.mxu0 0.0
        %1042 = vmatpush1.xpose.msra.mxu0 0.0
        %1043 = vmatprep.subr.mxu0 0.0
        %1044 = vmatpush1.xpose.msra.mxu0 0.0
        %1045 = vmatprep.subr.mxu0 0.0
        %1046 = vmatpush1.xpose.msra.mxu0 0.0
        %1047 = vmatprep.subr.mxu0 0.0
        %1048 = vmatpush1.xpose.msra.mxu0 0.0
        %1049 = vmatprep.subr.mxu0 0.0
        %1050 = vmatpush1.xpose.msra.mxu0 0.0
        %1051 = vmatprep.subr.mxu0 0.0
        %1052 = vmatpush1.xpose.msra.mxu0 0.0
        %1053 = vmatprep.subr.mxu0 0.0
        %1054 = vmatpush1.xpose.msra.mxu0 0.0
        %1055 = vmatprep.subr.mxu0 0.0
        %1056 = vmatpush1.xpose.msra.mxu0 0.0
        %1057 = vmatprep.subr.mxu0 0.0
        %1058 = vmatpush1.xpose.msra.mxu0 0.0
        %1059 = vmatprep.subr.mxu0 0.0
        %1060 = vmatpush1.xpose.msra.mxu0 0.0
        %1061 = vmatprep.subr.mxu0 0.0
        %1062 = vmatpush1.xpose.msra.mxu0 0.0
        %1063 = vmatprep.subr.mxu0 0.0
        %1064 = vmatpush1.xpose.msra.mxu0 0.0
        %1065 = vmatprep.subr.mxu0 0.0
        %1066 = vmatpush1.xpose.msra.mxu0 0.0
        %1067 = vmatprep.subr.mxu0 0.0
        %1068 = vmatpush1.xpose.msra.mxu0 %v1035
        %1069 = vmatprep.subr.mxu0 0.0
        %1070 = vmatpush2.xpose.msra.mxu0 0.0
        %1071 = vmatprep.subr.mxu0 0.0
        %1072 = vmatpush2.xpose.msra.mxu0 0.0
        %1073 = vmatprep.subr.mxu0 0.0
        %1074 = vmatpush2.xpose.msra.mxu0 0.0
        %1075 = vmatprep.subr.mxu0 0.0
        %1076 = vmatpush2.xpose.msra.mxu0 0.0
        %1077 = vmatprep.subr.mxu0 0.0
        %1078 = vmatpush2.xpose.msra.mxu0 0.0
        %1079 = vmatprep.subr.mxu0 0.0
        %1080 = vmatpush2.xpose.msra.mxu0 0.0
        %1081 = vmatprep.subr.mxu0 0.0
        %1082 = vmatpush2.xpose.msra.mxu0 0.0
        %1083 = vmatprep.subr.mxu0 0.0
        %1084 = vmatpush2.xpose.msra.mxu0 0.0
        %1085 = vmatprep.subr.mxu0 0.0
        %1086 = vmatpush2.xpose.msra.mxu0 0.0
        %1087 = vmatprep.subr.mxu0 0.0
        %1088 = vmatpush2.xpose.msra.mxu0 0.0
        %1089 = vmatprep.subr.mxu0 0.0
        %1090 = vmatpush2.xpose.msra.mxu0 0.0
        %1091 = vmatprep.subr.mxu0 0.0
        %1092 = vmatpush2.xpose.msra.mxu0 0.0
        %1093 = vmatprep.subr.mxu0 0.0
        %1094 = vmatpush2.xpose.msra.mxu0 0.0
        %1095 = vmatprep.subr.mxu0 0.0
        %1096 = vmatpush2.xpose.msra.mxu0 0.0
        %1097 = vmatprep.subr.mxu0 0.0
        %1098 = vmatpush2.xpose.msra.mxu0 0.0
        %1099 = vmatprep.subr.mxu0 0.0
        %1100 = vmatpush2.xpose.msra.mxu0 0.0
        %1101 = vmatprep.mubr.f32.mxu0 0.0
        %1102 = vmatmul.mubr.f32.gmra.mxu0 %v1033
        %v1103 = vpop.f32.mrf.mxu0
        %v1104 = vadd.f32 0.0, %v1103
        %v1105 = vpop.f32.mrf.mxu0
        %1106 = vdwg.mxu0
        %v1107 = vmul.f32 %v1104, 0.35355338
        %v1108 = vsel %vm521, %v1107, -inf
        %1109 = vmax.xlane.f32.xlu0 %v1108
        %v1110 = vpop.xlane.xlu0 %1109
        %v1111 = vsub.f32 %v1107, %v1110
        %v1112 = vmul.f32 %v1111, 1.442695
        %v1113 = vpow.pop %v1112
        %v1114 = vsel %vm521, %v1113, 0.0
        %1115 = vadd.xlane.f32.xlu0 %v1114
        %v1116 = vpop.xlane.xlu0 %1115
        %v1117 = vrcp.pop %v1116
        %v1118 = vmul.f32 %v1113, %v1117
        %1119 = vrot.lane.b32.xlu0 %v515, 40
        %v1120 = vpop.permute.xlu0 %1119
        %v1123 = vsel %vm521, %v1118, 0
        %1125 = vmatprep.subr.mxu0 0.0
        %1126 = vmatpush1.msra.mxu0 0.0
        %1127 = vmatprep.subr.mxu0 0.0
        %1128 = vmatpush1.msra.mxu0 0.0
        %1129 = vmatprep.subr.mxu0 0.0
        %1130 = vmatpush1.msra.mxu0 0.0
        %1131 = vmatprep.subr.mxu0 0.0
        %1132 = vmatpush1.msra.mxu0 0.0
        %1133 = vmatprep.subr.mxu0 0.0
        %1134 = vmatpush1.msra.mxu0 0.0
        %1135 = vmatprep.subr.mxu0 0.0
        %1136 = vmatpush1.msra.mxu0 0.0
        %1137 = vmatprep.subr.mxu0 0.0
        %1138 = vmatpush1.msra.mxu0 0.0
        %1139 = vmatprep.subr.mxu0 0.0
        %1140 = vmatpush1.msra.mxu0 0.0
        %1141 = vmatprep.subr.mxu0 0.0
        %1142 = vmatpush1.msra.mxu0 0.0
        %1143 = vmatprep.subr.mxu0 0.0
        %1144 = vmatpush1.msra.mxu0 0.0
        %1145 = vmatprep.subr.mxu0 0.0
        %1146 = vmatpush1.msra.mxu0 0.0
        %1147 = vmatprep.subr.mxu0 0.0
        %1148 = vmatpush1.msra.mxu0 0.0
        %1149 = vmatprep.subr.mxu0 0.0
        %1150 = vmatpush1.msra.mxu0 0.0
        %1151 = vmatprep.subr.mxu0 0.0
        %1152 = vmatpush1.msra.mxu0 0.0
        %1153 = vmatprep.subr.mxu0 0.0
        %1154 = vmatpush1.msra.mxu0 0.0
        %1155 = vmatprep.subr.mxu0 0.0
        %1156 = vmatpush1.msra.mxu0 %v1120
        %1157 = vmatprep.subr.mxu0 0.0
        %1158 = vmatpush2.msra.mxu0 0.0
        %1159 = vmatprep.subr.mxu0 0.0
        %1160 = vmatpush2.msra.mxu0 0.0
        %1161 = vmatprep.subr.mxu0 0.0
        %1162 = vmatpush2.msra.mxu0 0.0
        %1163 = vmatprep.subr.mxu0 0.0
        %1164 = vmatpush2.msra.mxu0 0.0
        %1165 = vmatprep.subr.mxu0 0.0
        %1166 = vmatpush2.msra.mxu0 0.0
        %1167 = vmatprep.subr.mxu0 0.0
        %1168 = vmatpush2.msra.mxu0 0.0
        %1169 = vmatprep.subr.mxu0 0.0
        %1170 = vmatpush2.msra.mxu0 0.0
        %1171 = vmatprep.subr.mxu0 0.0
        %1172 = vmatpush2.msra.mxu0 0.0
        %1173 = vmatprep.subr.mxu0 0.0
        %1174 = vmatpush2.msra.mxu0 0.0
        %1175 = vmatprep.subr.mxu0 0.0
        %1176 = vmatpush2.msra.mxu0 0.0
        %1177 = vmatprep.subr.mxu0 0.0
        %1178 = vmatpush2.msra.mxu0 0.0
        %1179 = vmatprep.subr.mxu0 0.0
        %1180 = vmatpush2.msra.mxu0 0.0
        %1181 = vmatprep.subr.mxu0 0.0
        %1182 = vmatpush2.msra.mxu0 0.0
        %1183 = vmatprep.subr.mxu0 0.0
        %1184 = vmatpush2.msra.mxu0 0.0
        %1185 = vmatprep.subr.mxu0 0.0
        %1186 = vmatpush2.msra.mxu0 0.0
        %1187 = vmatprep.subr.mxu0 0.0
        %1188 = vmatpush2.msra.mxu0 0.0
        %1189 = vmatprep.mubr.f32.mxu0 0.0
        %1190 = vmatmul.mubr.f32.gmra.mxu0 %v1123
        %v1191 = vpop.f32.mrf.mxu0
        %v1192 = vadd.f32 0.0, %v1191
        %v1193 = vpop.f32.mrf.mxu0
        %1194 = vdwg.mxu0
        %1196 = vrot.lane.b32.xlu0 %v1192, 24
        %v1197 = vpop.permute.xlu0 %1196
        %vm1199 = vcmask 261312
        %1200 = vst.msk [vmem:[#allocation2] sm:$0xff] %vm1199, %v1197
        %v1201 = vld [vmem:[#allocation2] sm:$0xff]
        %v1202 = vld [vmem:[%s4] sm:$0xff]
        %v1203 = vld [vmem:[%s4 + $0x8] sm:$0xff]
        %v1204 = vld [vmem:[%s4 + $0x10] sm:$0xff]
        %v1205 = vld [vmem:[%s4 + $0x18] sm:$0xff]
        %v1207 = vsel %vm412, %v1201, 0
        %1209 = vmatprep.subr.mxu0 0.0
        %1210 = vmatpush1.msra.mxu0 0.0
        %1211 = vmatprep.subr.mxu0 0.0
        %1212 = vmatpush1.msra.mxu0 0.0
        %1213 = vmatprep.subr.mxu0 0.0
        %1214 = vmatpush1.msra.mxu0 0.0
        %1215 = vmatprep.subr.mxu0 0.0
        %1216 = vmatpush1.msra.mxu0 0.0
        %1217 = vmatprep.subr.mxu0 0.0
        %1218 = vmatpush1.msra.mxu0 0.0
        %1219 = vmatprep.subr.mxu0 0.0
        %1220 = vmatpush1.msra.mxu0 0.0
        %1221 = vmatprep.subr.mxu0 0.0
        %1222 = vmatpush1.msra.mxu0 0.0
        %1223 = vmatprep.subr.mxu0 0.0
        %1224 = vmatpush1.msra.mxu0 0.0
        %1225 = vmatprep.subr.mxu0 0.0
        %1226 = vmatpush1.msra.mxu0 0.0
        %1227 = vmatprep.subr.mxu0 0.0
        %1228 = vmatpush1.msra.mxu0 0.0
        %1229 = vmatprep.subr.mxu0 0.0
        %1230 = vmatpush1.msra.mxu0 0.0
        %1231 = vmatprep.subr.mxu0 0.0
        %1232 = vmatpush1.msra.mxu0 0.0
        %1233 = vmatprep.subr.mxu0 0.0
        %1234 = vmatpush1.msra.mxu0 %v1205
        %1235 = vmatprep.subr.mxu0 0.0
        %1236 = vmatpush1.msra.mxu0 %v1204
        %1237 = vmatprep.subr.mxu0 0.0
        %1238 = vmatpush1.msra.mxu0 %v1203
        %1239 = vmatprep.subr.mxu0 0.0
        %1240 = vmatpush1.msra.mxu0 %v1202
        %1241 = vmatprep.subr.mxu0 0.0
        %1242 = vmatpush2.msra.mxu0 0.0
        %1243 = vmatprep.subr.mxu0 0.0
        %1244 = vmatpush2.msra.mxu0 0.0
        %1245 = vmatprep.subr.mxu0 0.0
        %1246 = vmatpush2.msra.mxu0 0.0
        %1247 = vmatprep.subr.mxu0 0.0
        %1248 = vmatpush2.msra.mxu0 0.0
        %1249 = vmatprep.subr.mxu0 0.0
        %1250 = vmatpush2.msra.mxu0 0.0
        %1251 = vmatprep.subr.mxu0 0.0
        %1252 = vmatpush2.msra.mxu0 0.0
        %1253 = vmatprep.subr.mxu0 0.0
        %1254 = vmatpush2.msra.mxu0 0.0
        %1255 = vmatprep.subr.mxu0 0.0
        %1256 = vmatpush2.msra.mxu0 0.0
        %1257 = vmatprep.subr.mxu0 0.0
        %1258 = vmatpush2.msra.mxu0 0.0
        %1259 = vmatprep.subr.mxu0 0.0
        %1260 = vmatpush2.msra.mxu0 0.0
        %1261 = vmatprep.subr.mxu0 0.0
        %1262 = vmatpush2.msra.mxu0 0.0
        %1263 = vmatprep.subr.mxu0 0.0
        %1264 = vmatpush2.msra.mxu0 0.0
        %1265 = vmatprep.subr.mxu0 0.0
        %1266 = vmatpush2.msra.mxu0 0.0
        %1267 = vmatprep.subr.mxu0 0.0
        %1268 = vmatpush2.msra.mxu0 0.0
        %1269 = vmatprep.subr.mxu0 0.0
        %1270 = vmatpush2.msra.mxu0 0.0
        %1271 = vmatprep.subr.mxu0 0.0
        %1272 = vmatpush2.msra.mxu0 0.0
        %1273 = vmatprep.mubr.f32.mxu0 0.0
        %1274 = vmatmul.mubr.f32.gmra.mxu0 %v1207
        %v1275 = vpop.f32.mrf.mxu0
        %v1276 = vadd.f32 0.0, %v1275
        %v1277 = vpop.f32.mrf.mxu0
        %1278 = vdwg.mxu0
        %v1279 = vadd.f32 %v409, %v1276
        %v1280 = vld [vmem:[%s5] sm:$0x1]
        %v1282 = vlaneseq
        %v1283 = vshrl.u32 %v1282, 7
        %v1284 = vsub.s32 0, %v1283
        %v1285 = vrot.slane %v1280, %v1284
        %v1287 = vadd.f32 %v1279, %v1285
        %v1288 = vld [vmem:[%s6] sm:$0x1]
        %v1289 = vld [vmem:[%s7] sm:$0x1]
        %v1290 = vsel %vm412, %v1287, 0.0
        %1291 = vadd.xlane.f32.xlu0 %v1290
        %v1292 = vpop.xlane.xlu0 %1291
        %v1293 = vmul.f32 %v1292, %v416
        %v1294 = vsub.f32 %v1287, %v1293
        %v1295 = vmul.f32 %v1294, %v1294
        %v1296 = vsel %vm412, %v1295, 0.0
        %1297 = vadd.xlane.f32.xlu0 %v1296
        %v1298 = vpop.xlane.xlu0 %1297
        %v1299 = vmul.f32 %v1298, %v416
        %v1300 = vadd.f32 %v1299, 1e-05
        %v1301 = vrsqrt.pop %v1300
        %v1302 = vmul.f32 %v1294, %v1301
        %v1304 = vlaneseq
        %v1305 = vshrl.u32 %v1304, 7
        %v1306 = vsub.s32 0, %v1305
        %v1307 = vrot.slane %v1288, %v1306
        %v1309 = vmul.f32 %v1302, %v1307
        %v1311 = vlaneseq
        %v1312 = vshrl.u32 %v1311, 7
        %v1313 = vsub.s32 0, %v1312
        %v1314 = vrot.slane %v1289, %v1313
        %v1316 = vadd.f32 %v1309, %v1314
        %v1317 = vld [vmem:[%s8] sm:$0xff]
        %v1318 = vld [vmem:[%s8 + $0x8] sm:$0xff]
        %v1319 = vld [vmem:[%s8 + $0x10] sm:$0xff]
        %v1320 = vld [vmem:[%s8 + $0x18] sm:$0xff]
        %v1321 = vld [vmem:[%s9] sm:$0x1]
        %v1323 = vlaneseq
        %v1324 = vshrl.u32 %v1323, 7
        %v1325 = vsub.s32 0, %v1324
        %v1326 = vrot.slane %v1321, %v1325
        %v1329 = vsel %vm412, %v1316, 0
        %1331 = vmatprep.subr.mxu0 0.0
        %1332 = vmatpush1.msra.mxu0 0.0
        %1333 = vmatprep.subr.mxu0 0.0
        %1334 = vmatpush1.msra.mxu0 0.0
        %1335 = vmatprep.subr.mxu0 0.0
        %1336 = vmatpush1.msra.mxu0 0.0
        %1337 = vmatprep.subr.mxu0 0.0
        %1338 = vmatpush1.msra.mxu0 0.0
        %1339 = vmatprep.subr.mxu0 0.0
        %1340 = vmatpush1.msra.mxu0 0.0
        %1341 = vmatprep.subr.mxu0 0.0
        %1342 = vmatpush1.msra.mxu0 0.0
        %1343 = vmatprep.subr.mxu0 0.0
        %1344 = vmatpush1.msra.mxu0 0.0
        %1345 = vmatprep.subr.mxu0 0.0
        %1346 = vmatpush1.msra.mxu0 0.0
        %1347 = vmatprep.subr.mxu0 0.0
        %1348 = vmatpush1.msra.mxu0 0.0
        %1349 = vmatprep.subr.mxu0 0.0
        %1350 = vmatpush1.msra.mxu0 0.0
        %1351 = vmatprep.subr.mxu0 0.0
        %1352 = vmatpush1.msra.mxu0 0.0
        %1353 = vmatprep.subr.mxu0 0.0
        %1354 = vmatpush1.msra.mxu0 0.0
        %1355 = vmatprep.subr.mxu0 0.0
        %1356 = vmatpush1.msra.mxu0 %v1320
        %1357 = vmatprep.subr.mxu0 0.0
        %1358 = vmatpush1.msra.mxu0 %v1319
        %1359 = vmatprep.subr.mxu0 0.0
        %1360 = vmatpush1.msra.mxu0 %v1318
        %1361 = vmatprep.subr.mxu0 0.0
        %1362 = vmatpush1.msra.mxu0 %v1317
        %1363 = vmatprep.subr.mxu0 0.0
        %1364 = vmatpush2.msra.mxu0 0.0
        %1365 = vmatprep.subr.mxu0 0.0
        %1366 = vmatpush2.msra.mxu0 0.0
        %1367 = vmatprep.subr.mxu0 0.0
        %1368 = vmatpush2.msra.mxu0 0.0
        %1369 = vmatprep.subr.mxu0 0.0
        %1370 = vmatpush2.msra.mxu0 0.0
        %1371 = vmatprep.subr.mxu0 0.0
        %1372 = vmatpush2.msra.mxu0 0.0
        %1373 = vmatprep.subr.mxu0 0.0
        %1374 = vmatpush2.msra.mxu0 0.0
        %1375 = vmatprep.subr.mxu0 0.0
        %1376 = vmatpush2.msra.mxu0 0.0
        %1377 = vmatprep.subr.mxu0 0.0
        %1378 = vmatpush2.msra.mxu0 0.0
        %1379 = vmatprep.subr.mxu0 0.0
        %1380 = vmatpush2.msra.mxu0 0.0
        %1381 = vmatprep.subr.mxu0 0.0
        %1382 = vmatpush2.msra.mxu0 0.0
        %1383 = vmatprep.subr.mxu0 0.0
        %1384 = vmatpush2.msra.mxu0 0.0
        %1385 = vmatprep.subr.mxu0 0.0
        %1386 = vmatpush2.msra.mxu0 0.0
        %1387 = vmatprep.subr.mxu0 0.0
        %1388 = vmatpush2.msra.mxu0 0.0
        %1389 = vmatprep.subr.mxu0 0.0
        %1390 = vmatpush2.msra.mxu0 0.0
        %1391 = vmatprep.subr.mxu0 0.0
        %1392 = vmatpush2.msra.mxu0 0.0
        %1393 = vmatprep.subr.mxu0 0.0
        %1394 = vmatpush2.msra.mxu0 0.0
        %1395 = vmatprep.mubr.f32.mxu0 0.0
        %1396 = vmatmul.mubr.f32.gmra.mxu0 %v1329
        %v1397 = vpop.f32.mrf.mxu0
        %v1398 = vadd.f32 %v1326, %v1397
        %v1399 = vpop.f32.mrf.mxu0
        %1400 = vdwg.mxu0
        %v1401 = vmul.f32 %v1398, 0.5
        %v1402 = vmul.f32 %v1398, 0.044715
        %v1403 = vmul.f32 %v1402, %v1398
        %v1404 = vmul.f32 %v1403, %v1398
        %v1405 = vadd.f32 %v1398, %v1404
        %v1406 = vmul.f32 %v1405, 0.7978846
        %v1407 = vtanh.pop %v1406
        %v1408 = vadd.f32 %v1407, 1.0
        %v1409 = vmul.f32 %v1401, %v1408
        %v1410 = vld [vmem:[%s10] sm:$0xff]
        %v1411 = vld [vmem:[%s10 + $0x8] sm:$0xff]
        %v1412 = vld [vmem:[%s10 + $0x10] sm:$0xff]
        %v1413 = vld [vmem:[%s10 + $0x18] sm:$0xff]
        %v1414 = vld [vmem:[%s10 + $0x20] sm:$0xff]
        %v1415 = vld [vmem:[%s10 + $0x28] sm:$0xff]
        %v1416 = vld [vmem:[%s10 + $0x30] sm:$0xff]
        %v1417 = vld [vmem:[%s10 + $0x38] sm:$0xff]
        %v1418 = vld [vmem:[%s10 + $0x40] sm:$0xff]
        %v1419 = vld [vmem:[%s10 + $0x48] sm:$0xff]
        %v1420 = vld [vmem:[%s10 + $0x50] sm:$0xff]
        %v1421 = vld [vmem:[%s10 + $0x58] sm:$0xff]
        %v1422 = vld [vmem:[%s10 + $0x60] sm:$0xff]
        %v1423 = vld [vmem:[%s10 + $0x68] sm:$0xff]
        %v1424 = vld [vmem:[%s10 + $0x70] sm:$0xff]
        %v1425 = vld [vmem:[%s10 + $0x78] sm:$0xff]
        %v1426 = vld [vmem:[%s11] sm:$0x1]
        %v1428 = vlaneseq
        %v1429 = vshrl.u32 %v1428, 7
        %v1430 = vsub.s32 0, %v1429
        %v1431 = vrot.slane %v1426, %v1430
        %1433 = vmatprep.subr.mxu0 0.0
        %1434 = vmatpush1.msra.mxu0 %v1425
        %1435 = vmatprep.subr.mxu0 0.0
        %1436 = vmatpush1.msra.mxu0 %v1424
        %1437 = vmatprep.subr.mxu0 0.0
        %1438 = vmatpush1.msra.mxu0 %v1423
        %1439 = vmatprep.subr.mxu0 0.0
        %1440 = vmatpush1.msra.mxu0 %v1422
        %1441 = vmatprep.subr.mxu0 0.0
        %1442 = vmatpush1.msra.mxu0 %v1421
        %1443 = vmatprep.subr.mxu0 0.0
        %1444 = vmatpush1.msra.mxu0 %v1420
        %1445 = vmatprep.subr.mxu0 0.0
        %1446 = vmatpush1.msra.mxu0 %v1419
        %1447 = vmatprep.subr.mxu0 0.0
        %1448 = vmatpush1.msra.mxu0 %v1418
        %1449 = vmatprep.subr.mxu0 0.0
        %1450 = vmatpush1.msra.mxu0 %v1417
        %1451 = vmatprep.subr.mxu0 0.0
        %1452 = vmatpush1.msra.mxu0 %v1416
        %1453 = vmatprep.subr.mxu0 0.0
        %1454 = vmatpush1.msra.mxu0 %v1415
        %1455 = vmatprep.subr.mxu0 0.0
        %1456 = vmatpush1.msra.mxu0 %v1414
        %1457 = vmatprep.subr.mxu0 0.0
        %1458 = vmatpush1.msra.mxu0 %v1413
        %1459 = vmatprep.subr.mxu0 0.0
        %1460 = vmatpush1.msra.mxu0 %v1412
        %1461 = vmatprep.subr.mxu0 0.0
        %1462 = vmatpush1.msra.mxu0 %v1411
        %1463 = vmatprep.subr.mxu0 0.0
        %1464 = vmatpush1.msra.mxu0 %v1410
        %1465 = vmatprep.subr.mxu0 0.0
        %1466 = vmatpush2.msra.mxu0 0.0
        %1467 = vmatprep.subr.mxu0 0.0
        %1468 = vmatpush2.msra.mxu0 0.0
        %1469 = vmatprep.subr.mxu0 0.0
        %1470 = vmatpush2.msra.mxu0 0.0
        %1471 = vmatprep.subr.mxu0 0.0
        %1472 = vmatpush2.msra.mxu0 0.0
        %1473 = vmatprep.subr.mxu0 0.0
        %1474 = vmatpush2.msra.mxu0 0.0
        %1475 = vmatprep.subr.mxu0 0.0
        %1476 = vmatpush2.msra.mxu0 0.0
        %1477 = vmatprep.subr.mxu0 0.0
        %1478 = vmatpush2.msra.mxu0 0.0
        %1479 = vmatprep.subr.mxu0 0.0
        %1480 = vmatpush2.msra.mxu0 0.0
        %1481 = vmatprep.subr.mxu0 0.0
        %1482 = vmatpush2.msra.mxu0 0.0
        %1483 = vmatprep.subr.mxu0 0.0
        %1484 = vmatpush2.msra.mxu0 0.0
        %1485 = vmatprep.subr.mxu0 0.0
        %1486 = vmatpush2.msra.mxu0 0.0
        %1487 = vmatprep.subr.mxu0 0.0
        %1488 = vmatpush2.msra.mxu0 0.0
        %1489 = vmatprep.subr.mxu0 0.0
        %1490 = vmatpush2.msra.mxu0 0.0
        %1491 = vmatprep.subr.mxu0 0.0
        %1492 = vmatpush2.msra.mxu0 0.0
        %1493 = vmatprep.subr.mxu0 0.0
        %1494 = vmatpush2.msra.mxu0 0.0
        %1495 = vmatprep.subr.mxu0 0.0
        %1496 = vmatpush2.msra.mxu0 0.0
        %1497 = vmatprep.mubr.f32.mxu0 0.0
        %1498 = vmatmul.mubr.f32.gmra.mxu0 %v1409
        %v1499 = vpop.f32.mrf.mxu0
        %v1500 = vadd.f32 %v1431, %v1499
        %v1501 = vpop.f32.mrf.mxu0
        %1502 = vdwg.mxu0
        %v1503 = vadd.f32 %v1287, %v1500
        %1504 = vst.msk [vmem:[%s404] sm:$0xff] %vm412, %v1503
        %s1505 = sand.u32 %s291, 1
        %s1506 = scalar_lea.sflag [#allocation4], %s1505
        %s1507 = sand.u32 %s291, 1
        %s1508 = smul.addr %s1507, 8
        %s1509 = scalar_lea.vmem [#allocation3], %s1508
        // Predicated region
        $region69: #{tpu_custom_call.1} parent=67 // pred_check
          %p1510 = pneg %p301
        $region70: #{tpu_custom_call.1} parent=67 // pred_check_branch
          %1512 = sbr.rel (%p1510) target = $region72
        $region71: #{tpu_custom_call.1} parent=67 // pred_region
          %s1514 = ssub.s32 128, 128
          %1515 = vsyncadd %s1506, %s1514
          %s1516 = smul.addr %s26, 128
          %s1517 = scalar_lea.hbm %s12, %s1516
          %s1519 = sshll.u32 %s1509, 4
          %s1520 = int_to_ptr.vmem [resolvable:$true] %s1519
          %1522 = dma.vmem_to_hbm [thread:$0]  %s1520, 128, %s1517, %s1506
        $region72: #{tpu_custom_call.1} parent=67 // pred_fallthru
          _
      $region68: #{tpu_custom_call.1} parent=5 // pred_fallthru
        _
      %p1523 = scmp.le.s32.totalorder 2, %s21
      // Predicated region
      $region73: #{tpu_custom_call.1} parent=5 // pred_check
        %p1524 = pneg %p1523
      $region74: #{tpu_custom_call.1} parent=5 // pred_check_branch
        %1526 = sbr.rel (%p1524) target = $region76
      $region75: #{tpu_custom_call.1} parent=5 // pred_region
        %s1527 = ssub.s32 %s21, 2
        // Predicated region
        $region77: #{tpu_custom_call.1} parent=75 // pred_check
          %p1528 = pneg %p307
        $region78: #{tpu_custom_call.1} parent=75 // pred_check_branch
          %1530 = sbr.rel (%p1528) target = $region80
        $region79: #{tpu_custom_call.1} parent=75 // pred_region
          %s1531 = sand.u32 %s292, 1
          %s1532 = scalar_lea.sflag [#allocation4], %s1531
          %s1533 = sand.u32 %s292, 1
          %s1534 = smul.addr %s1533, 8
          %s1535 = scalar_lea.vmem [#allocation3], %s1534
          %1536 = dma.done %s1532, 128
        $region80: #{tpu_custom_call.1} parent=75 // pred_fallthru
          _
      $region76: #{tpu_custom_call.1} parent=5 // pred_fallthru
        _
    $region6: #{tpu_custom_call.1} parent=1 // loop_footer
      %s25 = sadd.s32 1, %s21
    $region7: #{tpu_custom_call.1} parent=1 // loop_footer_branch
      %20 = sbr.rel target = $region3
    $region8: #{tpu_custom_call.1} parent=1 // loop_exit
      _
    %1537 = vsyncpa [#allocation4], 1
    %s1538 = scalar_lea.sflag [#allocation4], 1
    %1539 = vsyncpa %s1538, 1

</llo_original>
